<compile_context>
chip_gen: v6e
topology: v6e:2x2x1
jax: 0.10.0
libtpu: 0.0.40
codegen_flags: <defaults>
</compile_context>

<pallas_src>
import functools

import jax
import jax.numpy as jnp
from jax import lax
from jax.experimental import pallas as pl
from jax.experimental.pallas import tpu as pltpu


def _self_attention_kernel(x_ref, wqkv_ref, wo_ref, o_ref, ctx_ref, *, heads):
    # x_ref    : (GB, N, D)  f32 input block
    # wqkv_ref : (D, 3D)     bf16, q columns pre-scaled by d**-0.5
    # wo_ref   : (D, D)      bf16
    # o_ref    : (GB, N, D)
    # ctx_ref  : (GB*N, D)   bf16 VMEM scratch (merged-head context)
    gb, n, d = x_ref.shape
    dh = d // heads

    x = x_ref[...].reshape(gb * n, d).astype(jnp.bfloat16)       # (GB*N, D)
    wqkv = wqkv_ref[...]                                         # bf16 (D, 3D)
    wo = wo_ref[...]                                             # bf16 (D, D)

    # One fused large-M projection on the MXU; f32 accumulation.
    qkv = jnp.dot(x, wqkv, preferred_element_type=jnp.float32)   # (GB*N, 3D)

    # Static lane slices (free views at real widths); bf16 MXU operands.
    q = qkv[:, 0 * d:1 * d].astype(jnp.bfloat16)                 # already scaled
    k = qkv[:, 1 * d:2 * d].astype(jnp.bfloat16)
    v = qkv[:, 2 * d:3 * d].astype(jnp.bfloat16)

    # Attention per (batch element, head) with static lane slices:
    #  - dot_general contracts the trailing dh dims directly (no k.T),
    #  - softmax runs on a single head's (N, N) scores in f32,
    #  - the head context is written straight into the bf16 scratch, so no
    #    list/concatenate and no long-lived vreg ranges across heads.
    for g in range(gb):
        rows = slice(g * n, (g + 1) * n)
        for h in range(heads):
            cols = slice(h * dh, (h + 1) * dh)
            qh = q[rows, cols]                                   # (N, dh)
            kh = k[rows, cols]
            vh = v[rows, cols]

            s = lax.dot_general(qh, kh, (((1,), (1,)), ((), ())),
                                preferred_element_type=jnp.float32)   # (N, N)

            m = jnp.max(s, axis=-1, keepdims=True)
            p = jnp.exp(s - m)
            denom = jnp.sum(p, axis=-1, keepdims=True)
            p = p * pl.reciprocal(denom, approx=True)            # EUP slot

            ctx = jnp.dot(p.astype(jnp.bfloat16), vh,
                          preferred_element_type=jnp.float32)    # (N, dh)
            ctx_ref[rows, cols] = ctx.astype(jnp.bfloat16)

    # Single large-M output projection over the whole block.
    out = jnp.dot(ctx_ref[...], wo, preferred_element_type=jnp.float32)
    o_ref[...] = out.reshape(gb, n, d).astype(o_ref.dtype)


def _default_batch_block(b):
    """Largest divisor of b that still gives >= 2 grid steps (v7x: 2 TCs)."""
    if b <= 1:
        return max(b, 1)
    for gb in range(b // 2, 0, -1):
        if b % gb == 0:
            return gb
    return 1


def _vmem_budget_bytes(gb, n, d, in_bytes, out_bytes):
    """Rough per-step VMEM estimate derived from the actual block sizes."""
    blk_in = 2 * gb * n * d * in_bytes          # double-buffered x block
    blk_out = 2 * gb * n * d * out_bytes        # double-buffered out block
    weights = (d * 3 * d + d * d) * 2           # bf16, single-buffered
    proj = gb * n * 3 * d * (4 + 2)             # f32 qkv + bf16 q/k/v
    scores = n * n * (4 + 2)                    # one head's f32 scores + bf16 p
    ctx = gb * n * d * 2                        # bf16 ctx scratch
    return blk_in + blk_out + weights + proj + scores + ctx


def self_attention(x, w_qkv, w_out, *, heads, batch_block=None):
    """x: (B, N, D); w_qkv: (D, 3D) (= to_chunks.weight.T); w_out: (D, D)."""
    b, n, d = x.shape
    assert d % heads == 0
    gb = _default_batch_block(b) if batch_block is None else min(batch_block, b)
    assert b % gb == 0, "batch must be divisible by batch_block"

    # Fold the d**-0.5 score scale into the q columns of the fused QKV weight
    # (exact: the projection is linear; applied in f32, then one bf16 cast).
    scale = float(d) ** -0.5
    col_scale = jnp.concatenate([jnp.full((d,), scale, jnp.float32),
                                 jnp.ones((2 * d,), jnp.float32)])
    wqkv_bf16 = (w_qkv.astype(jnp.float32) * col_scale[None, :]).astype(jnp.bfloat16)
    wo_bf16 = w_out.astype(jnp.bfloat16)

    # VMEM budget: derived from block sizes, clamped to 3/4 of physical VMEM
    # (48 MiB on v7x, ~96 MiB on v5e/v6e).
    try:
        phys_vmem = int(pltpu.get_tpu_info().vmem_capacity_bytes)
    except Exception:
        phys_vmem = 64 * 1024 * 1024            # conservative (v7x)
    est = _vmem_budget_bytes(gb, n, d, x.dtype.itemsize, x.dtype.itemsize)
    vmem_limit = int(max(16 * 1024 * 1024, min((3 * phys_vmem) // 4, 2 * est)))

    kernel = functools.partial(_self_attention_kernel, heads=heads)
    return pl.pallas_call(
        kernel,
        out_shape=jax.ShapeDtypeStruct((b, n, d), x.dtype),
        grid_spec=pltpu.PrefetchScalarGridSpec(
            num_scalar_prefetch=0,
            grid=(b // gb,),
            in_specs=[
                pl.BlockSpec((gb, n, d), lambda i: (i, 0, 0)),
                # Whole-array, single-buffered VMEM residents (constant index):
                pl.BlockSpec(memory_space=pltpu.MemorySpace.VMEM),
                pl.BlockSpec(memory_space=pltpu.MemorySpace.VMEM),
            ],
            out_specs=pl.BlockSpec((gb, n, d), lambda i: (i, 0, 0)),
            scratch_shapes=[pltpu.VMEM((gb * n, d), jnp.bfloat16)],
        ),
        compiler_params=pltpu.CompilerParams(
            dimension_semantics=("parallel",),    # batch tiles shard across TCs
            vmem_limit_bytes=vmem_limit,
        ),
    )(x, wqkv_bf16, wo_bf16)


def self_attention_ref(x, w_qkv, w_out, *, heads):
    """Plain-JAX f32 reference mirroring the PyTorch forward."""
    b, n, d = x.shape
    dh = d // heads
    qkv = x @ w_qkv
    q, k, v = jnp.split(qkv, 3, axis=-1)

    def split_heads(t):
        return t.reshape(b, n, heads, dh).transpose(0, 2, 1, 3)

    q, k, v = map(split_heads, (q, k, v))
    wei = (q @ jnp.swapaxes(k, -2, -1)) * d ** (-0.5)
    wei = jax.nn.softmax(wei, axis=-1)
    out = (wei @ v).transpose(0, 2, 1, 3).reshape(b, n, d)
    return out @ w_out


if __name__ == "__main__":
    key = jax.random.PRNGKey(0)
    B, N, D, HEADS = 2, 8, 32, 8

    kx, kq, ko = jax.random.split(key, 3)
    x = jax.random.normal(kx, (B, N, D), dtype=jnp.float32)

    # Deterministic "Linear(bias=False)" weights, stored as (in, out) so the
    # kernel does x @ W directly (PyTorch stores (out, in)).
    bound = 1.0 / (D ** 0.5)
    w_qkv = jax.random.uniform(kq, (D, 3 * D), minval=-bound, maxval=bound,
                               dtype=jnp.float32)
    w_out = jax.random.uniform(ko, (D, D), minval=-bound, maxval=bound,
                               dtype=jnp.float32)

    ref = self_attention_ref(x, w_qkv, w_out, heads=HEADS)

    # Default: >= 2 grid steps (B=2 -> grid=(2,)) so the parallel axis can
    # shard across v7x's two TensorCores.
    out = jax.block_until_ready(self_attention(x, w_qkv, w_out, heads=HEADS))
    assert out.shape == (B, N, D)
    # bf16 MXU operands + approx EUP reciprocal -> ~1% level deviation vs the
    # pure-f32 reference; tolerance loosened accordingly.
    assert jnp.allclose(out, ref, rtol=3e-2, atol=3e-2), \
        "mismatch vs reference (default batch tiling)"

    # Single maximal block (the right default on single-TC v5e/v6e).
    out_full = jax.block_until_ready(
        self_attention(x, w_qkv, w_out, heads=HEADS, batch_block=B))
    assert jnp.allclose(out_full, ref, rtol=3e-2, atol=3e-2), \
        "mismatch vs reference (batch_block=B)"

    print("KERNEL_OK")
</pallas_src>

<mosaic_0001>
module attributes {stable_mosaic.version = 11 : i64} {
  func.func @_self_attention_kernel(%arg0: i32, %arg1: memref<1x8x32xf32, #tpu.memory_space<vmem>>, %arg2: memref<32x96xbf16, #tpu.memory_space<vmem>>, %arg3: memref<32x32xbf16, #tpu.memory_space<vmem>>, %arg4: memref<1x8x32xf32, #tpu.memory_space<vmem>>, %arg5: memref<8x32xbf16, #tpu.memory_space<vmem>>) attributes {dimension_semantics = [#tpu.dimension_semantics<parallel>], iteration_bounds = array<i64: 2>, scalar_prefetch = 0 : i64, scratch_operands = 1 : i64, tpu.core_type = #tpu.core_type<tc>, window_params = [{transform_indices = @transform_0, window_bounds = array<i64: 1, 8, 32>}, {pipeline_mode = #tpu.pipeline_mode<synchronous>, transform_indices = @transform_1, window_bounds = array<i64: 32, 96>}, {pipeline_mode = #tpu.pipeline_mode<synchronous>, transform_indices = @transform_2, window_bounds = array<i64: 32, 32>}, {transform_indices = @transform_3, window_bounds = array<i64: 1, 8, 32>}]} {
    %c0 = arith.constant 0 : index
    %c0_0 = arith.constant 0 : index
    %c0_1 = arith.constant 0 : index
    %0 = vector.load %arg1[%c0, %c0_0, %c0_1] : memref<1x8x32xf32, #tpu.memory_space<vmem>>, vector<1x8x32xf32>
    %1 = vector.shape_cast %0 : vector<1x8x32xf32> to vector<8x32xf32>
    %2 = arith.truncf %1 : vector<8x32xf32> to vector<8x32xbf16>
    %c0_2 = arith.constant 0 : index
    %c0_3 = arith.constant 0 : index
    %3 = vector.load %arg2[%c0_2, %c0_3] : memref<32x96xbf16, #tpu.memory_space<vmem>>, vector<32x96xbf16>
    %c0_4 = arith.constant 0 : index
    %c0_5 = arith.constant 0 : index
    %4 = vector.load %arg3[%c0_4, %c0_5] : memref<32x32xbf16, #tpu.memory_space<vmem>>, vector<32x32xbf16>
    %cst = arith.constant dense<0.000000e+00> : vector<8x96xf32>
    %5 = tpu.matmul %2, %3, %cst {dimension_numbers = #tpu.dot_dimension_numbers<[1], [0], [0], [1], [0, 0, 1, 1], [], []>} : vector<8x32xbf16>, vector<32x96xbf16>, vector<8x96xf32> -> vector<8x96xf32>
    %6 = vector.extract_strided_slice %5 {offsets = [0, 0], sizes = [8, 32], strides = [1, 1]} : vector<8x96xf32> to vector<8x32xf32>
    %7 = arith.truncf %6 : vector<8x32xf32> to vector<8x32xbf16>
    %8 = vector.extract_strided_slice %5 {offsets = [0, 32], sizes = [8, 32], strides = [1, 1]} : vector<8x96xf32> to vector<8x32xf32>
    %9 = arith.truncf %8 : vector<8x32xf32> to vector<8x32xbf16>
    %10 = vector.extract_strided_slice %5 {offsets = [0, 64], sizes = [8, 32], strides = [1, 1]} : vector<8x96xf32> to vector<8x32xf32>
    %11 = arith.truncf %10 : vector<8x32xf32> to vector<8x32xbf16>
    %12 = vector.extract_strided_slice %7 {offsets = [0, 0], sizes = [8, 4], strides = [1, 1]} : vector<8x32xbf16> to vector<8x4xbf16>
    %13 = vector.extract_strided_slice %9 {offsets = [0, 0], sizes = [8, 4], strides = [1, 1]} : vector<8x32xbf16> to vector<8x4xbf16>
    %14 = vector.extract_strided_slice %11 {offsets = [0, 0], sizes = [8, 4], strides = [1, 1]} : vector<8x32xbf16> to vector<8x4xbf16>
    %cst_6 = arith.constant dense<0.000000e+00> : vector<8x8xf32>
    %15 = tpu.matmul %12, %13, %cst_6 {dimension_numbers = #tpu.dot_dimension_numbers<[1], [1], [0], [0], [0, 0, 1, 0], [], []>} : vector<8x4xbf16>, vector<8x4xbf16>, vector<8x8xf32> -> vector<8x8xf32>
    %cst_7 = arith.constant dense<0xFF800000> : vector<8xf32>
    %16 = vector.multi_reduction <maximumf>, %15, %cst_7 [1] : vector<8x8xf32> to vector<8xf32>
    %17 = vector.shape_cast %16 : vector<8xf32> to vector<8x1xf32>
    %18 = vector.broadcast %17 : vector<8x1xf32> to vector<8x8xf32>
    %19 = arith.subf %15, %18 : vector<8x8xf32>
    %20 = math.exp %19 : vector<8x8xf32>
    %cst_8 = arith.constant dense<0.000000e+00> : vector<8xf32>
    %21 = vector.multi_reduction <add>, %20, %cst_8 [1] : vector<8x8xf32> to vector<8xf32>
    %22 = vector.shape_cast %21 : vector<8xf32> to vector<8x1xf32>
    %23 = tpu.reciprocal %22 {approx = true} : vector<8x1xf32> -> vector<8x1xf32>
    %24 = vector.broadcast %23 : vector<8x1xf32> to vector<8x8xf32>
    %25 = arith.mulf %20, %24 : vector<8x8xf32>
    %26 = arith.truncf %25 : vector<8x8xf32> to vector<8x8xbf16>
    %cst_9 = arith.constant dense<0.000000e+00> : vector<8x4xf32>
    %27 = tpu.matmul %26, %14, %cst_9 {dimension_numbers = #tpu.dot_dimension_numbers<[1], [0], [0], [1], [0, 0, 1, 1], [], []>} : vector<8x8xbf16>, vector<8x4xbf16>, vector<8x4xf32> -> vector<8x4xf32>
    %28 = arith.truncf %27 : vector<8x4xf32> to vector<8x4xbf16>
    %c0_10 = arith.constant 0 : index
    %c0_11 = arith.constant 0 : index
    %29 = vector.load %arg5[%c0_10, %c0_11] : memref<8x32xbf16, #tpu.memory_space<vmem>>, vector<8x4xbf16>
    tpu.vector_store %arg5[%c0_10, %c0_11], %28 {strides = array<i32>} : memref<8x32xbf16, #tpu.memory_space<vmem>>, vector<8x4xbf16>,
    %30 = vector.extract_strided_slice %7 {offsets = [0, 4], sizes = [8, 4], strides = [1, 1]} : vector<8x32xbf16> to vector<8x4xbf16>
    %31 = vector.extract_strided_slice %9 {offsets = [0, 4], sizes = [8, 4], strides = [1, 1]} : vector<8x32xbf16> to vector<8x4xbf16>
    %32 = vector.extract_strided_slice %11 {offsets = [0, 4], sizes = [8, 4], strides = [1, 1]} : vector<8x32xbf16> to vector<8x4xbf16>
    %cst_12 = arith.constant dense<0.000000e+00> : vector<8x8xf32>
    %33 = tpu.matmul %30, %31, %cst_12 {dimension_numbers = #tpu.dot_dimension_numbers<[1], [1], [0], [0], [0, 0, 1, 0], [], []>} : vector<8x4xbf16>, vector<8x4xbf16>, vector<8x8xf32> -> vector<8x8xf32>
    %cst_13 = arith.constant dense<0xFF800000> : vector<8xf32>
    %34 = vector.multi_reduction <maximumf>, %33, %cst_13 [1] : vector<8x8xf32> to vector<8xf32>
    %35 = vector.shape_cast %34 : vector<8xf32> to vector<8x1xf32>
    %36 = vector.broadcast %35 : vector<8x1xf32> to vector<8x8xf32>
    %37 = arith.subf %33, %36 : vector<8x8xf32>
    %38 = math.exp %37 : vector<8x8xf32>
    %cst_14 = arith.constant dense<0.000000e+00> : vector<8xf32>
    %39 = vector.multi_reduction <add>, %38, %cst_14 [1] : vector<8x8xf32> to vector<8xf32>
    %40 = vector.shape_cast %39 : vector<8xf32> to vector<8x1xf32>
    %41 = tpu.reciprocal %40 {approx = true} : vector<8x1xf32> -> vector<8x1xf32>
    %42 = vector.broadcast %41 : vector<8x1xf32> to vector<8x8xf32>
    %43 = arith.mulf %38, %42 : vector<8x8xf32>
    %44 = arith.truncf %43 : vector<8x8xf32> to vector<8x8xbf16>
    %cst_15 = arith.constant dense<0.000000e+00> : vector<8x4xf32>
    %45 = tpu.matmul %44, %32, %cst_15 {dimension_numbers = #tpu.dot_dimension_numbers<[1], [0], [0], [1], [0, 0, 1, 1], [], []>} : vector<8x8xbf16>, vector<8x4xbf16>, vector<8x4xf32> -> vector<8x4xf32>
    %46 = arith.truncf %45 : vector<8x4xf32> to vector<8x4xbf16>
    %c0_16 = arith.constant 0 : index
    %c4 = arith.constant 4 : index
    %47 = vector.load %arg5[%c0_16, %c4] : memref<8x32xbf16, #tpu.memory_space<vmem>>, vector<8x4xbf16>
    tpu.vector_store %arg5[%c0_16, %c4], %46 {strides = array<i32>} : memref<8x32xbf16, #tpu.memory_space<vmem>>, vector<8x4xbf16>,
    %48 = vector.extract_strided_slice %7 {offsets = [0, 8], sizes = [8, 4], strides = [1, 1]} : vector<8x32xbf16> to vector<8x4xbf16>
    %49 = vector.extract_strided_slice %9 {offsets = [0, 8], sizes = [8, 4], strides = [1, 1]} : vector<8x32xbf16> to vector<8x4xbf16>
    %50 = vector.extract_strided_slice %11 {offsets = [0, 8], sizes = [8, 4], strides = [1, 1]} : vector<8x32xbf16> to vector<8x4xbf16>
    %cst_17 = arith.constant dense<0.000000e+00> : vector<8x8xf32>
    %51 = tpu.matmul %48, %49, %cst_17 {dimension_numbers = #tpu.dot_dimension_numbers<[1], [1], [0], [0], [0, 0, 1, 0], [], []>} : vector<8x4xbf16>, vector<8x4xbf16>, vector<8x8xf32> -> vector<8x8xf32>
    %cst_18 = arith.constant dense<0xFF800000> : vector<8xf32>
    %52 = vector.multi_reduction <maximumf>, %51, %cst_18 [1] : vector<8x8xf32> to vector<8xf32>
    %53 = vector.shape_cast %52 : vector<8xf32> to vector<8x1xf32>
    %54 = vector.broadcast %53 : vector<8x1xf32> to vector<8x8xf32>
    %55 = arith.subf %51, %54 : vector<8x8xf32>
    %56 = math.exp %55 : vector<8x8xf32>
    %cst_19 = arith.constant dense<0.000000e+00> : vector<8xf32>
    %57 = vector.multi_reduction <add>, %56, %cst_19 [1] : vector<8x8xf32> to vector<8xf32>
    %58 = vector.shape_cast %57 : vector<8xf32> to vector<8x1xf32>
    %59 = tpu.reciprocal %58 {approx = true} : vector<8x1xf32> -> vector<8x1xf32>
    %60 = vector.broadcast %59 : vector<8x1xf32> to vector<8x8xf32>
    %61 = arith.mulf %56, %60 : vector<8x8xf32>
    %62 = arith.truncf %61 : vector<8x8xf32> to vector<8x8xbf16>
    %cst_20 = arith.constant dense<0.000000e+00> : vector<8x4xf32>
    %63 = tpu.matmul %62, %50, %cst_20 {dimension_numbers = #tpu.dot_dimension_numbers<[1], [0], [0], [1], [0, 0, 1, 1], [], []>} : vector<8x8xbf16>, vector<8x4xbf16>, vector<8x4xf32> -> vector<8x4xf32>
    %64 = arith.truncf %63 : vector<8x4xf32> to vector<8x4xbf16>
    %c0_21 = arith.constant 0 : index
    %c8 = arith.constant 8 : index
    %65 = vector.load %arg5[%c0_21, %c8] : memref<8x32xbf16, #tpu.memory_space<vmem>>, vector<8x4xbf16>
    tpu.vector_store %arg5[%c0_21, %c8], %64 {strides = array<i32>} : memref<8x32xbf16, #tpu.memory_space<vmem>>, vector<8x4xbf16>,
    %66 = vector.extract_strided_slice %7 {offsets = [0, 12], sizes = [8, 4], strides = [1, 1]} : vector<8x32xbf16> to vector<8x4xbf16>
    %67 = vector.extract_strided_slice %9 {offsets = [0, 12], sizes = [8, 4], strides = [1, 1]} : vector<8x32xbf16> to vector<8x4xbf16>
    %68 = vector.extract_strided_slice %11 {offsets = [0, 12], sizes = [8, 4], strides = [1, 1]} : vector<8x32xbf16> to vector<8x4xbf16>
    %cst_22 = arith.constant dense<0.000000e+00> : vector<8x8xf32>
    %69 = tpu.matmul %66, %67, %cst_22 {dimension_numbers = #tpu.dot_dimension_numbers<[1], [1], [0], [0], [0, 0, 1, 0], [], []>} : vector<8x4xbf16>, vector<8x4xbf16>, vector<8x8xf32> -> vector<8x8xf32>
    %cst_23 = arith.constant dense<0xFF800000> : vector<8xf32>
    %70 = vector.multi_reduction <maximumf>, %69, %cst_23 [1] : vector<8x8xf32> to vector<8xf32>
    %71 = vector.shape_cast %70 : vector<8xf32> to vector<8x1xf32>
    %72 = vector.broadcast %71 : vector<8x1xf32> to vector<8x8xf32>
    %73 = arith.subf %69, %72 : vector<8x8xf32>
    %74 = math.exp %73 : vector<8x8xf32>
    %cst_24 = arith.constant dense<0.000000e+00> : vector<8xf32>
    %75 = vector.multi_reduction <add>, %74, %cst_24 [1] : vector<8x8xf32> to vector<8xf32>
    %76 = vector.shape_cast %75 : vector<8xf32> to vector<8x1xf32>
    %77 = tpu.reciprocal %76 {approx = true} : vector<8x1xf32> -> vector<8x1xf32>
    %78 = vector.broadcast %77 : vector<8x1xf32> to vector<8x8xf32>
    %79 = arith.mulf %74, %78 : vector<8x8xf32>
    %80 = arith.truncf %79 : vector<8x8xf32> to vector<8x8xbf16>
    %cst_25 = arith.constant dense<0.000000e+00> : vector<8x4xf32>
    %81 = tpu.matmul %80, %68, %cst_25 {dimension_numbers = #tpu.dot_dimension_numbers<[1], [0], [0], [1], [0, 0, 1, 1], [], []>} : vector<8x8xbf16>, vector<8x4xbf16>, vector<8x4xf32> -> vector<8x4xf32>
    %82 = arith.truncf %81 : vector<8x4xf32> to vector<8x4xbf16>
    %c0_26 = arith.constant 0 : index
    %c12 = arith.constant 12 : index
    %83 = vector.load %arg5[%c0_26, %c12] : memref<8x32xbf16, #tpu.memory_space<vmem>>, vector<8x4xbf16>
    tpu.vector_store %arg5[%c0_26, %c12], %82 {strides = array<i32>} : memref<8x32xbf16, #tpu.memory_space<vmem>>, vector<8x4xbf16>,
    %84 = vector.extract_strided_slice %7 {offsets = [0, 16], sizes = [8, 4], strides = [1, 1]} : vector<8x32xbf16> to vector<8x4xbf16>
    %85 = vector.extract_strided_slice %9 {offsets = [0, 16], sizes = [8, 4], strides = [1, 1]} : vector<8x32xbf16> to vector<8x4xbf16>
    %86 = vector.extract_strided_slice %11 {offsets = [0, 16], sizes = [8, 4], strides = [1, 1]} : vector<8x32xbf16> to vector<8x4xbf16>
    %cst_27 = arith.constant dense<0.000000e+00> : vector<8x8xf32>
    %87 = tpu.matmul %84, %85, %cst_27 {dimension_numbers = #tpu.dot_dimension_numbers<[1], [1], [0], [0], [0, 0, 1, 0], [], []>} : vector<8x4xbf16>, vector<8x4xbf16>, vector<8x8xf32> -> vector<8x8xf32>
    %cst_28 = arith.constant dense<0xFF800000> : vector<8xf32>
    %88 = vector.multi_reduction <maximumf>, %87, %cst_28 [1] : vector<8x8xf32> to vector<8xf32>
    %89 = vector.shape_cast %88 : vector<8xf32> to vector<8x1xf32>
    %90 = vector.broadcast %89 : vector<8x1xf32> to vector<8x8xf32>
    %91 = arith.subf %87, %90 : vector<8x8xf32>
    %92 = math.exp %91 : vector<8x8xf32>
    %cst_29 = arith.constant dense<0.000000e+00> : vector<8xf32>
    %93 = vector.multi_reduction <add>, %92, %cst_29 [1] : vector<8x8xf32> to vector<8xf32>
    %94 = vector.shape_cast %93 : vector<8xf32> to vector<8x1xf32>
    %95 = tpu.reciprocal %94 {approx = true} : vector<8x1xf32> -> vector<8x1xf32>
    %96 = vector.broadcast %95 : vector<8x1xf32> to vector<8x8xf32>
    %97 = arith.mulf %92, %96 : vector<8x8xf32>
    %98 = arith.truncf %97 : vector<8x8xf32> to vector<8x8xbf16>
    %cst_30 = arith.constant dense<0.000000e+00> : vector<8x4xf32>
    %99 = tpu.matmul %98, %86, %cst_30 {dimension_numbers = #tpu.dot_dimension_numbers<[1], [0], [0], [1], [0, 0, 1, 1], [], []>} : vector<8x8xbf16>, vector<8x4xbf16>, vector<8x4xf32> -> vector<8x4xf32>
    %100 = arith.truncf %99 : vector<8x4xf32> to vector<8x4xbf16>
    %c0_31 = arith.constant 0 : index
    %c16 = arith.constant 16 : index
    %101 = vector.load %arg5[%c0_31, %c16] : memref<8x32xbf16, #tpu.memory_space<vmem>>, vector<8x4xbf16>
    tpu.vector_store %arg5[%c0_31, %c16], %100 {strides = array<i32>} : memref<8x32xbf16, #tpu.memory_space<vmem>>, vector<8x4xbf16>,
    %102 = vector.extract_strided_slice %7 {offsets = [0, 20], sizes = [8, 4], strides = [1, 1]} : vector<8x32xbf16> to vector<8x4xbf16>
    %103 = vector.extract_strided_slice %9 {offsets = [0, 20], sizes = [8, 4], strides = [1, 1]} : vector<8x32xbf16> to vector<8x4xbf16>
    %104 = vector.extract_strided_slice %11 {offsets = [0, 20], sizes = [8, 4], strides = [1, 1]} : vector<8x32xbf16> to vector<8x4xbf16>
    %cst_32 = arith.constant dense<0.000000e+00> : vector<8x8xf32>
    %105 = tpu.matmul %102, %103, %cst_32 {dimension_numbers = #tpu.dot_dimension_numbers<[1], [1], [0], [0], [0, 0, 1, 0], [], []>} : vector<8x4xbf16>, vector<8x4xbf16>, vector<8x8xf32> -> vector<8x8xf32>
    %cst_33 = arith.constant dense<0xFF800000> : vector<8xf32>
    %106 = vector.multi_reduction <maximumf>, %105, %cst_33 [1] : vector<8x8xf32> to vector<8xf32>
    %107 = vector.shape_cast %106 : vector<8xf32> to vector<8x1xf32>
    %108 = vector.broadcast %107 : vector<8x1xf32> to vector<8x8xf32>
    %109 = arith.subf %105, %108 : vector<8x8xf32>
    %110 = math.exp %109 : vector<8x8xf32>
    %cst_34 = arith.constant dense<0.000000e+00> : vector<8xf32>
    %111 = vector.multi_reduction <add>, %110, %cst_34 [1] : vector<8x8xf32> to vector<8xf32>
    %112 = vector.shape_cast %111 : vector<8xf32> to vector<8x1xf32>
    %113 = tpu.reciprocal %112 {approx = true} : vector<8x1xf32> -> vector<8x1xf32>
    %114 = vector.broadcast %113 : vector<8x1xf32> to vector<8x8xf32>
    %115 = arith.mulf %110, %114 : vector<8x8xf32>
    %116 = arith.truncf %115 : vector<8x8xf32> to vector<8x8xbf16>
    %cst_35 = arith.constant dense<0.000000e+00> : vector<8x4xf32>
    %117 = tpu.matmul %116, %104, %cst_35 {dimension_numbers = #tpu.dot_dimension_numbers<[1], [0], [0], [1], [0, 0, 1, 1], [], []>} : vector<8x8xbf16>, vector<8x4xbf16>, vector<8x4xf32> -> vector<8x4xf32>
    %118 = arith.truncf %117 : vector<8x4xf32> to vector<8x4xbf16>
    %c0_36 = arith.constant 0 : index
    %c20 = arith.constant 20 : index
    %119 = vector.load %arg5[%c0_36, %c20] : memref<8x32xbf16, #tpu.memory_space<vmem>>, vector<8x4xbf16>
    tpu.vector_store %arg5[%c0_36, %c20], %118 {strides = array<i32>} : memref<8x32xbf16, #tpu.memory_space<vmem>>, vector<8x4xbf16>,
    %120 = vector.extract_strided_slice %7 {offsets = [0, 24], sizes = [8, 4], strides = [1, 1]} : vector<8x32xbf16> to vector<8x4xbf16>
    %121 = vector.extract_strided_slice %9 {offsets = [0, 24], sizes = [8, 4], strides = [1, 1]} : vector<8x32xbf16> to vector<8x4xbf16>
    %122 = vector.extract_strided_slice %11 {offsets = [0, 24], sizes = [8, 4], strides = [1, 1]} : vector<8x32xbf16> to vector<8x4xbf16>
    %cst_37 = arith.constant dense<0.000000e+00> : vector<8x8xf32>
    %123 = tpu.matmul %120, %121, %cst_37 {dimension_numbers = #tpu.dot_dimension_numbers<[1], [1], [0], [0], [0, 0, 1, 0], [], []>} : vector<8x4xbf16>, vector<8x4xbf16>, vector<8x8xf32> -> vector<8x8xf32>
    %cst_38 = arith.constant dense<0xFF800000> : vector<8xf32>
    %124 = vector.multi_reduction <maximumf>, %123, %cst_38 [1] : vector<8x8xf32> to vector<8xf32>
    %125 = vector.shape_cast %124 : vector<8xf32> to vector<8x1xf32>
    %126 = vector.broadcast %125 : vector<8x1xf32> to vector<8x8xf32>
    %127 = arith.subf %123, %126 : vector<8x8xf32>
    %128 = math.exp %127 : vector<8x8xf32>
    %cst_39 = arith.constant dense<0.000000e+00> : vector<8xf32>
    %129 = vector.multi_reduction <add>, %128, %cst_39 [1] : vector<8x8xf32> to vector<8xf32>
    %130 = vector.shape_cast %129 : vector<8xf32> to vector<8x1xf32>
    %131 = tpu.reciprocal %130 {approx = true} : vector<8x1xf32> -> vector<8x1xf32>
    %132 = vector.broadcast %131 : vector<8x1xf32> to vector<8x8xf32>
    %133 = arith.mulf %128, %132 : vector<8x8xf32>
    %134 = arith.truncf %133 : vector<8x8xf32> to vector<8x8xbf16>
    %cst_40 = arith.constant dense<0.000000e+00> : vector<8x4xf32>
    %135 = tpu.matmul %134, %122, %cst_40 {dimension_numbers = #tpu.dot_dimension_numbers<[1], [0], [0], [1], [0, 0, 1, 1], [], []>} : vector<8x8xbf16>, vector<8x4xbf16>, vector<8x4xf32> -> vector<8x4xf32>
    %136 = arith.truncf %135 : vector<8x4xf32> to vector<8x4xbf16>
    %c0_41 = arith.constant 0 : index
    %c24 = arith.constant 24 : index
    %137 = vector.load %arg5[%c0_41, %c24] : memref<8x32xbf16, #tpu.memory_space<vmem>>, vector<8x4xbf16>
    tpu.vector_store %arg5[%c0_41, %c24], %136 {strides = array<i32>} : memref<8x32xbf16, #tpu.memory_space<vmem>>, vector<8x4xbf16>,
    %138 = vector.extract_strided_slice %7 {offsets = [0, 28], sizes = [8, 4], strides = [1, 1]} : vector<8x32xbf16> to vector<8x4xbf16>
    %139 = vector.extract_strided_slice %9 {offsets = [0, 28], sizes = [8, 4], strides = [1, 1]} : vector<8x32xbf16> to vector<8x4xbf16>
    %140 = vector.extract_strided_slice %11 {offsets = [0, 28], sizes = [8, 4], strides = [1, 1]} : vector<8x32xbf16> to vector<8x4xbf16>
    %cst_42 = arith.constant dense<0.000000e+00> : vector<8x8xf32>
    %141 = tpu.matmul %138, %139, %cst_42 {dimension_numbers = #tpu.dot_dimension_numbers<[1], [1], [0], [0], [0, 0, 1, 0], [], []>} : vector<8x4xbf16>, vector<8x4xbf16>, vector<8x8xf32> -> vector<8x8xf32>
    %cst_43 = arith.constant dense<0xFF800000> : vector<8xf32>
    %142 = vector.multi_reduction <maximumf>, %141, %cst_43 [1] : vector<8x8xf32> to vector<8xf32>
    %143 = vector.shape_cast %142 : vector<8xf32> to vector<8x1xf32>
    %144 = vector.broadcast %143 : vector<8x1xf32> to vector<8x8xf32>
    %145 = arith.subf %141, %144 : vector<8x8xf32>
    %146 = math.exp %145 : vector<8x8xf32>
    %cst_44 = arith.constant dense<0.000000e+00> : vector<8xf32>
    %147 = vector.multi_reduction <add>, %146, %cst_44 [1] : vector<8x8xf32> to vector<8xf32>
    %148 = vector.shape_cast %147 : vector<8xf32> to vector<8x1xf32>
    %149 = tpu.reciprocal %148 {approx = true} : vector<8x1xf32> -> vector<8x1xf32>
    %150 = vector.broadcast %149 : vector<8x1xf32> to vector<8x8xf32>
    %151 = arith.mulf %146, %150 : vector<8x8xf32>
    %152 = arith.truncf %151 : vector<8x8xf32> to vector<8x8xbf16>
    %cst_45 = arith.constant dense<0.000000e+00> : vector<8x4xf32>
    %153 = tpu.matmul %152, %140, %cst_45 {dimension_numbers = #tpu.dot_dimension_numbers<[1], [0], [0], [1], [0, 0, 1, 1], [], []>} : vector<8x8xbf16>, vector<8x4xbf16>, vector<8x4xf32> -> vector<8x4xf32>
    %154 = arith.truncf %153 : vector<8x4xf32> to vector<8x4xbf16>
    %c0_46 = arith.constant 0 : index
    %c28 = arith.constant 28 : index
    %155 = vector.load %arg5[%c0_46, %c28] : memref<8x32xbf16, #tpu.memory_space<vmem>>, vector<8x4xbf16>
    tpu.vector_store %arg5[%c0_46, %c28], %154 {strides = array<i32>} : memref<8x32xbf16, #tpu.memory_space<vmem>>, vector<8x4xbf16>,
    %c0_47 = arith.constant 0 : index
    %c0_48 = arith.constant 0 : index
    %156 = vector.load %arg5[%c0_47, %c0_48] : memref<8x32xbf16, #tpu.memory_space<vmem>>, vector<8x32xbf16>
    %cst_49 = arith.constant dense<0.000000e+00> : vector<8x32xf32>
    %157 = tpu.matmul %156, %4, %cst_49 {dimension_numbers = #tpu.dot_dimension_numbers<[1], [0], [0], [1], [0, 0, 1, 1], [], []>} : vector<8x32xbf16>, vector<32x32xbf16>, vector<8x32xf32> -> vector<8x32xf32>
    %158 = vector.shape_cast %157 : vector<8x32xf32> to vector<1x8x32xf32>
    %c0_50 = arith.constant 0 : index
    %c0_51 = arith.constant 0 : index
    %c0_52 = arith.constant 0 : index
    %159 = vector.load %arg4[%c0_50, %c0_51, %c0_52] : memref<1x8x32xf32, #tpu.memory_space<vmem>>, vector<1x8x32xf32>
    tpu.vector_store %arg4[%c0_50, %c0_51, %c0_52], %158 {strides = array<i32>} : memref<1x8x32xf32, #tpu.memory_space<vmem>>, vector<1x8x32xf32>,
    return
  }
  func.func @transform_0(%arg0: i32) -> (i32, i32, i32) {
    %c0_i32 = arith.constant 0 : i32
    %c0_i32_0 = arith.constant 0 : i32
    %c0_i32_1 = arith.constant 0 : i32
    return %arg0, %c0_i32, %c0_i32_0 : i32, i32, i32
  }
  func.func @transform_1(%arg0: i32) -> (i32, i32) {
    %c0_i32 = arith.constant 0 : i32
    %c0_i32_0 = arith.constant 0 : i32
    %c0_i32_1 = arith.constant 0 : i32
    return %c0_i32, %c0_i32_0 : i32, i32
  }
  func.func @transform_2(%arg0: i32) -> (i32, i32) {
    %c0_i32 = arith.constant 0 : i32
    %c0_i32_0 = arith.constant 0 : i32
    %c0_i32_1 = arith.constant 0 : i32
    return %c0_i32, %c0_i32_0 : i32, i32
  }
  func.func @transform_3(%arg0: i32) -> (i32, i32, i32) {
    %c0_i32 = arith.constant 0 : i32
    %c0_i32_0 = arith.constant 0 : i32
    %c0_i32_1 = arith.constant 0 : i32
    return %arg0, %c0_i32, %c0_i32_0 : i32, i32, i32
  }
}

</mosaic_0001>

<llo_original>
// kernel: tpu_custom_call.1
$region0: #{tpu_custom_call.1}
  #allocation0 [shape = 'u32[]', space=smem, size = 0x4, offset = 0x4, fixed_abs, tag = 'smem constant byte address 0x4 - core index']
  #allocation1 [shape = 'u32[144,128]{1,0:T(1,128)}', space=vmem, size = 0x12000, scoped, tag = 'internal scratch']
  #allocation2 [shape = 'bf16[8,32]{1,0:T(8,128)(2,1)}', space=vmem, size = 0x800, scoped, tag = 'scratch operand']
  %s0 = inlined_call_operand.hbm [shape: f32[2,8,32], index: 0, kind: input, shape index: {}]
  %s1 = inlined_call_operand.hbm [shape: bf16[32,96], index: 1, kind: input, shape index: {}]
  %s2 = inlined_call_operand.hbm [shape: bf16[32,32], index: 2, kind: input, shape index: {}]
  %s3 = inlined_call_operand.hbm [shape: f32[2,8,32], index: 3, kind: output, shape index: {}]
  %s4 = sld [smem:[#allocation0]]
  $region57: #{tpu_custom_call.1} parent=0
    _
  %s6 = ssub.s32 1, %s4
  %s7 = scalar_select 0, %s6, %s4
  $region1: #{tpu_custom_call.1} parent=0
    #allocation3 [shape = 'u8[8192]{0}', space=vmem, size = 0x2000, scoped, tag = 'input window, operand 0']
    #allocation4 [shape = 's32[2]{0}', space=sflag, size = 0x8, scoped, tag = 'scoped memory for tpu_custom_call.1']
    #allocation5 [shape = 's32[2]{0}', space=sflag, size = 0x8, scoped, tag = 'scoped memory for tpu_custom_call.1']
    #allocation6 [shape = 'u8[8192]{0}', space=vmem, size = 0x2000, scoped, tag = 'input window, operand 1, single buffered']
    #allocation7 [shape = 's32[1]{0}', space=sflag, size = 0x4, scoped, tag = 'scoped memory for tpu_custom_call.1']
    #allocation8 [shape = 'u8[8192]{0}', space=vmem, size = 0x2000, scoped, tag = 'input window, operand 2, single buffered']
    #allocation9 [shape = 'u8[8192]{0}', space=vmem, size = 0x2000, scoped, tag = 'output window, operand 0']
    %8 = vsyncpa [#allocation4], 0
    %s9 = scalar_lea.sflag [#allocation4], 1
    %10 = vsyncpa %s9, 0
    %11 = vsyncpa [#allocation7], 0
    %12 = vsyncpa [#allocation5], 0
    %s13 = scalar_lea.sflag [#allocation5], 1
    %14 = vsyncpa %s13, 0
    loop: start=0, step=1, limit=4
    $region2: #{tpu_custom_call.1} parent=1 // loop_pre_header
      _
    $region3: #{tpu_custom_call.1} parent=1 // loop_header
      %s16 = sphi 0, %s20
      %p17 = scmp.ge.s32.totalorder %s16, 4
      %s26 = sphi 0, %s28
      %s29 = sphi 0, %s26
      %s30 = sphi 0, %s29
      %s46 = sphi 0, %s30
      %s50 = sphi 0, %s50
      %s52 = sphi 0, %s50
      %s53 = sphi 0, %s52
      %s67 = sphi 0, %s53
      %s71 = sphi 0, %s71
      %s73 = sphi 0, %s71
      %s74 = sphi 0, %s73
      %s88 = sphi 0, %s74
      %s94 = sphi 0, %s96
      %s97 = sphi 0, %s94
      %s98 = sphi 0, %s97
      %s114 = sphi 0, %s98
    $region4: #{tpu_custom_call.1} parent=1 // loop_header_branch
      %19 = sbr.rel (%p17) target = $region8
    $region5: #{tpu_custom_call.1} parent=1 // loop_body
      %s21 = ssub.s32 %s16, 1
      %s22 = ssub.s32 %s16, 2
      %s23 = sadd.s32 %s16, 1
      %s24 = ssub.s32 %s16, %s23
      %p25 = scmp.eq.s32.totalorder %s24, 0
      %s27 = sadd.s32 %s26, 1
      %s28 = scalar_select %p25, %s26, %s27
      %p31 = pneg %p25
      %p32 = scmp.eq.s32.totalorder %s16, 1
      %p33 = por %p31, %p32
      %p34 = scmp.ne.s32.totalorder %s26, %s29
      %p35 = scmp.eq.s32.totalorder %s16, 0
      %p36 = por %p34, %p35
      %p37 = scmp.ne.s32.totalorder %s26, %s29
      %p38 = scmp.eq.s32.totalorder %s21, 1
      %p39 = por %p37, %p38
      %p40 = scmp.ne.s32.totalorder %s29, %s30
      %p41 = scmp.eq.s32.totalorder %s21, 0
      %p42 = por %p40, %p41
      %p43 = scmp.ne.s32.totalorder %s29, %s30
      %p44 = scmp.eq.s32.totalorder %s22, 1
      %p45 = por %p43, %p44
      %p47 = scmp.ne.s32.totalorder %s30, %s46
      %p48 = scmp.eq.s32.totalorder %s22, 0
      %p49 = por %p47, %p48
      %s51 = sadd.s32 %s50, 1
      %p54 = scmp.eq.s32.totalorder %s16, 1
      %p55 = scmp.ne.s32.totalorder %s50, %s52
      %p56 = scmp.eq.s32.totalorder %s16, 0
      %p57 = por %p55, %p56
      %p58 = scmp.ne.s32.totalorder %s50, %s52
      %p59 = scmp.eq.s32.totalorder %s21, 1
      %p60 = por %p58, %p59
      %p61 = scmp.ne.s32.totalorder %s52, %s53
      %p62 = scmp.eq.s32.totalorder %s21, 0
      %p63 = por %p61, %p62
      %p64 = scmp.ne.s32.totalorder %s52, %s53
      %p65 = scmp.eq.s32.totalorder %s22, 1
      %p66 = por %p64, %p65
      %p68 = scmp.ne.s32.totalorder %s53, %s67
      %p69 = scmp.eq.s32.totalorder %s22, 0
      %p70 = por %p68, %p69
      %s72 = sadd.s32 %s71, 1
      %p75 = scmp.eq.s32.totalorder %s16, 1
      %p76 = scmp.ne.s32.totalorder %s71, %s73
      %p77 = scmp.eq.s32.totalorder %s16, 0
      %p78 = por %p76, %p77
      %p79 = scmp.ne.s32.totalorder %s71, %s73
      %p80 = scmp.eq.s32.totalorder %s21, 1
      %p81 = por %p79, %p80
      %p82 = scmp.ne.s32.totalorder %s73, %s74
      %p83 = scmp.eq.s32.totalorder %s21, 0
      %p84 = por %p82, %p83
      %p85 = scmp.ne.s32.totalorder %s73, %s74
      %p86 = scmp.eq.s32.totalorder %s22, 1
      %p87 = por %p85, %p86
      %p89 = scmp.ne.s32.totalorder %s74, %s88
      %p90 = scmp.eq.s32.totalorder %s22, 0
      %p91 = por %p89, %p90
      %s92 = ssub.s32 %s16, %s23
      %p93 = scmp.eq.s32.totalorder %s92, 0
      %s95 = sadd.s32 %s94, 1
      %s96 = scalar_select %p93, %s94, %s95
      %p99 = pneg %p93
      %p100 = scmp.eq.s32.totalorder %s16, 1
      %p101 = por %p99, %p100
      %p102 = scmp.ne.s32.totalorder %s94, %s97
      %p103 = scmp.eq.s32.totalorder %s16, 0
      %p104 = por %p102, %p103
      %p105 = scmp.ne.s32.totalorder %s94, %s97
      %p106 = scmp.eq.s32.totalorder %s21, 1
      %p107 = por %p105, %p106
      %p108 = scmp.ne.s32.totalorder %s97, %s98
      %p109 = scmp.eq.s32.totalorder %s21, 0
      %p110 = por %p108, %p109
      %p111 = scmp.ne.s32.totalorder %s97, %s98
      %p112 = scmp.eq.s32.totalorder %s22, 1
      %p113 = por %p111, %p112
      %p115 = scmp.ne.s32.totalorder %s98, %s114
      %p116 = scmp.eq.s32.totalorder %s22, 0
      %p117 = por %p115, %p116
      %p118 = scmp.le.s32.totalorder 1, %s16
      %p119 = scmp.lt.s32.totalorder %s16, 3
      %p120 = pnand %p118, %p119
      %p121 = pneg %p120
      // Predicated region
      $region9: #{tpu_custom_call.1} parent=5 // pred_check
        _
      $region10: #{tpu_custom_call.1} parent=5 // pred_check_branch
        %123 = sbr.rel (%p120) target = $region12
      $region11: #{tpu_custom_call.1} parent=5 // pred_region
        %s124 = ssub.s32 %s16, 1
        // Predicated region
        $region13: #{tpu_custom_call.1} parent=11 // pred_check
          %p125 = pneg %p63
        $region14: #{tpu_custom_call.1} parent=11 // pred_check_branch
          %127 = sbr.rel (%p125) target = $region16
        $region15: #{tpu_custom_call.1} parent=11 // pred_region
          %s129 = ssub.s32 256, 256
          %130 = vsyncadd [#allocation7], %s129
          %s131 = sshll.u32 [#allocation6], 4
          %s132 = int_to_ptr.vmem [resolvable:$true] %s131
          %137 = dma.hbm_to_vmem [thread:$0]  %s1, 256, %s132, [#allocation7], 64, 64, 4
        $region16: #{tpu_custom_call.1} parent=11 // pred_fallthru
          _
        // Predicated region
        $region17: #{tpu_custom_call.1} parent=11 // pred_check
          %p138 = pneg %p84
        $region18: #{tpu_custom_call.1} parent=11 // pred_check_branch
          %140 = sbr.rel (%p138) target = $region20
        $region19: #{tpu_custom_call.1} parent=11 // pred_region
          %s142 = ssub.s32 256, 256
          %143 = vsyncadd [#allocation7], %s142
          %s144 = sshll.u32 [#allocation8], 4
          %s145 = int_to_ptr.vmem [resolvable:$true] %s144
          %150 = dma.hbm_to_vmem [thread:$0]  %s2, 256, %s145, [#allocation7], 64, 64, 4
        $region20: #{tpu_custom_call.1} parent=11 // pred_fallthru
          _
      $region12: #{tpu_custom_call.1} parent=5 // pred_fallthru
        _
      %p151 = scmp.lt.s32.totalorder %s16, 2
      // Predicated region
      $region21: #{tpu_custom_call.1} parent=5 // pred_check
        %p152 = pneg %p151
      $region22: #{tpu_custom_call.1} parent=5 // pred_check_branch
        %154 = sbr.rel (%p152) target = $region24
      $region23: #{tpu_custom_call.1} parent=5 // pred_region
        // Predicated region
        $region25: #{tpu_custom_call.1} parent=23 // pred_check
          %p155 = pneg %p36
        $region26: #{tpu_custom_call.1} parent=23 // pred_check_branch
          %157 = sbr.rel (%p155) target = $region28
        $region27: #{tpu_custom_call.1} parent=23 // pred_region
          %s158 = sand.u32 %s26, 1
          %s159 = scalar_lea.sflag [#allocation4], %s158
          %s160 = sand.u32 %s26, 1
          %s161 = smul.addr %s160, 8
          %s162 = scalar_lea.vmem [#allocation3], %s161
          %s164 = ssub.s32 128, 128
          %165 = vsyncadd %s159, %s164
          %s166 = smul.addr %s16, 128
          %s167 = scalar_lea.hbm %s0, %s166
          %s169 = sshll.u32 %s162, 4
          %s170 = int_to_ptr.vmem [resolvable:$true] %s169
          %172 = dma.hbm_to_vmem [thread:$0]  %s167, 128, %s170, %s159
        $region28: #{tpu_custom_call.1} parent=23 // pred_fallthru
          _
      $region24: #{tpu_custom_call.1} parent=5 // pred_fallthru
        _
      %p173 = scmp.le.s32.totalorder 1, %s16
      %p174 = scmp.lt.s32.totalorder %s16, 3
      %p175 = pnand %p173, %p174
      %p176 = pneg %p175
      // Predicated region
      $region29: #{tpu_custom_call.1} parent=5 // pred_check
        _
      $region30: #{tpu_custom_call.1} parent=5 // pred_check_branch
        %178 = sbr.rel (%p175) target = $region32
      $region31: #{tpu_custom_call.1} parent=5 // pred_region
        %s179 = ssub.s32 %s16, 1
        %s180 = sand.u32 %s29, 1
        %s181 = scalar_lea.sflag [#allocation4], %s180
        %s182 = sand.u32 %s29, 1
        %s183 = smul.addr %s182, 8
        %s184 = scalar_lea.vmem [#allocation3], %s183
        // Predicated region
        $region33: #{tpu_custom_call.1} parent=31 // pred_check
          %p185 = pneg %p42
        $region34: #{tpu_custom_call.1} parent=31 // pred_check_branch
          %187 = sbr.rel (%p185) target = $region36
        $region35: #{tpu_custom_call.1} parent=31 // pred_region
          %188 = dma.done %s181, 128
        $region36: #{tpu_custom_call.1} parent=31 // pred_fallthru
          _
        // Predicated region
        $region37: #{tpu_custom_call.1} parent=31 // pred_check
          %p189 = pneg %p63
        $region38: #{tpu_custom_call.1} parent=31 // pred_check_branch
          %191 = sbr.rel (%p189) target = $region40
        $region39: #{tpu_custom_call.1} parent=31 // pred_region
          %192 = dma.done [#allocation7], 256
        $region40: #{tpu_custom_call.1} parent=31 // pred_fallthru
          _
        // Predicated region
        $region41: #{tpu_custom_call.1} parent=31 // pred_check
          %p193 = pneg %p84
        $region42: #{tpu_custom_call.1} parent=31 // pred_check_branch
          %195 = sbr.rel (%p193) target = $region44
        $region43: #{tpu_custom_call.1} parent=31 // pred_region
          %196 = dma.done [#allocation7], 256
        $region44: #{tpu_custom_call.1} parent=31 // pred_fallthru
          _
        %s197 = sand.u32 %s29, 1
        %s198 = scalar_lea.sflag [#allocation4], %s197
        %s199 = sand.u32 %s29, 1
        %s200 = smul.addr %s199, 8
        %s201 = scalar_lea.vmem [#allocation3], %s200
        %p202 = pneg %p42
        %p203 = pneg %p39
        %p204 = pneg %p63
        %p205 = pneg %p60
        %p206 = pneg %p84
        %p207 = pneg %p81
        %p208 = pneg %p110
        %p209 = pneg %p107
        %s210 = sand.u32 %s97, 1
        %s211 = scalar_lea.sflag [#allocation5], %s210
        %s212 = sand.u32 %s97, 1
        %s213 = smul.addr %s212, 8
        %s214 = scalar_lea.vmem [#allocation9], %s213
        %v216 = vld [vmem:[%s184] sm:$0xff]
        %v217 = vpack.c.bf16 %v216, %v216
        %v218 = vld [vmem:[#allocation6] sm:$0xf]
        %v219 = vld [vmem:[#allocation6 + $0x4] sm:$0xf]
        %v220 = vld [vmem:[#allocation6 + $0x8] sm:$0xf]
        %v221 = vld [vmem:[#allocation6 + $0xc] sm:$0xf]
        %v222 = vld [vmem:[#allocation8] sm:$0xf]
        %v223 = vld [vmem:[#allocation8 + $0x4] sm:$0xf]
        %v224 = vld [vmem:[#allocation8 + $0x8] sm:$0xf]
        %v225 = vld [vmem:[#allocation8 + $0xc] sm:$0xf]
        %v230 = vunpack.c.l.b16 %v218
        %v231 = vunpack.c.l.b16 %v219
        %v232 = vunpack.c.l.b16 %v220
        %v233 = vunpack.c.l.b16 %v221
        %v234 = vpack.c.b16 %v231, %v230
        %v235 = vpack.c.b16 %v233, %v232
        %vm238 = vcmask 261120
        %v240 = vsel %vm238, %v217, 0
        %242 = vmatprep.subr.bf16.mxu0 0
        %243 = vmatpush1.bf16.msra.mxu0 0
        %244 = vmatprep.subr.bf16.mxu0 0
        %245 = vmatpush1.bf16.msra.mxu0 0
        %246 = vmatprep.subr.bf16.mxu0 0
        %247 = vmatpush1.bf16.msra.mxu0 0
        %248 = vmatprep.subr.bf16.mxu0 0
        %249 = vmatpush1.bf16.msra.mxu0 0
        %250 = vmatprep.subr.bf16.mxu0 0
        %251 = vmatpush1.bf16.msra.mxu0 0
        %252 = vmatprep.subr.bf16.mxu0 0
        %253 = vmatpush1.bf16.msra.mxu0 0
        %254 = vmatprep.subr.bf16.mxu0 0
        %255 = vmatpush1.bf16.msra.mxu0 %v235
        %256 = vmatprep.subr.bf16.mxu0 0
        %257 = vmatpush1.bf16.msra.mxu0 %v234
        %258 = vmatprep.subr.bf16.mxu0 0
        %259 = vmatpush2.bf16.msra.mxu0 0
        %260 = vmatprep.subr.bf16.mxu0 0
        %261 = vmatpush2.bf16.msra.mxu0 0
        %262 = vmatprep.subr.bf16.mxu0 0
        %263 = vmatpush2.bf16.msra.mxu0 0
        %264 = vmatprep.subr.bf16.mxu0 0
        %265 = vmatpush2.bf16.msra.mxu0 0
        %266 = vmatprep.subr.bf16.mxu0 0
        %267 = vmatpush2.bf16.msra.mxu0 0
        %268 = vmatprep.subr.bf16.mxu0 0
        %269 = vmatpush2.bf16.msra.mxu0 0
        %270 = vmatprep.subr.bf16.mxu0 0
        %271 = vmatpush2.bf16.msra.mxu0 0
        %272 = vmatprep.subr.bf16.mxu0 0
        %273 = vmatpush2.bf16.msra.mxu0 0
        %274 = vmatprep.mubr.bf16.mxu0 0
        %275 = vmatmul.mubr.bf16.gmra.mxu0 %v240
        %v276 = vpop.f32.mrf.mxu0
        %v277 = vadd.f32 0.0, %v276
        %v278 = vpop.f32.mrf.mxu0
        %v279 = vpop.f32.mrf.mxu0
        %v280 = vpop.f32.mrf.mxu0
        %281 = vdwg.mxu0
        %v282 = vpack.c.bf16 %v277, %v277
        %284 = vrot.lane.b32.xlu0 %v282, 96
        %v285 = vpop.permute.xlu0 %284
        %vm286 = vcmask 31744
        %v288 = vsel %vm286, %v282, 0
        %v291 = vsel %vm286, %v285, 0
        %293 = vmatprep.subr.bf16.mxu0 0
        %294 = vmatpush1.bf16.xpose.msra.mxu0 0
        %295 = vmatprep.subr.bf16.mxu0 0
        %296 = vmatpush1.bf16.xpose.msra.mxu0 0
        %297 = vmatprep.subr.bf16.mxu0 0
        %298 = vmatpush1.bf16.xpose.msra.mxu0 0
        %299 = vmatprep.subr.bf16.mxu0 0
        %300 = vmatpush1.bf16.xpose.msra.mxu0 0
        %301 = vmatprep.subr.bf16.mxu0 0
        %302 = vmatpush1.bf16.xpose.msra.mxu0 0
        %303 = vmatprep.subr.bf16.mxu0 0
        %304 = vmatpush1.bf16.xpose.msra.mxu0 0
        %305 = vmatprep.subr.bf16.mxu0 0
        %306 = vmatpush1.bf16.xpose.msra.mxu0 0
        %307 = vmatprep.subr.bf16.mxu0 0
        %308 = vmatpush1.bf16.xpose.msra.mxu0 %v291
        %309 = vmatprep.subr.bf16.mxu0 0
        %310 = vmatpush2.bf16.xpose.msra.mxu0 0
        %311 = vmatprep.subr.bf16.mxu0 0
        %312 = vmatpush2.bf16.xpose.msra.mxu0 0
        %313 = vmatprep.subr.bf16.mxu0 0
        %314 = vmatpush2.bf16.xpose.msra.mxu0 0
        %315 = vmatprep.subr.bf16.mxu0 0
        %316 = vmatpush2.bf16.xpose.msra.mxu0 0
        %317 = vmatprep.subr.bf16.mxu0 0
        %318 = vmatpush2.bf16.xpose.msra.mxu0 0
        %319 = vmatprep.subr.bf16.mxu0 0
        %320 = vmatpush2.bf16.xpose.msra.mxu0 0
        %321 = vmatprep.subr.bf16.mxu0 0
        %322 = vmatpush2.bf16.xpose.msra.mxu0 0
        %323 = vmatprep.subr.bf16.mxu0 0
        %324 = vmatpush2.bf16.xpose.msra.mxu0 0
        %325 = vmatprep.mubr.bf16.mxu0 0
        %326 = vmatmul.mubr.bf16.gmra.mxu0 %v288
        %v327 = vpop.f32.mrf.mxu0
        %v328 = vadd.f32 0.0, %v327
        %v329 = vpop.f32.mrf.mxu0
        %v330 = vpop.f32.mrf.mxu0
        %v331 = vpop.f32.mrf.mxu0
        %332 = vdwg.mxu0
        %vm333 = vcmask 64512
        %v334 = vsel %vm333, %v328, -inf
        %335 = vmax.xlane.f32.xlu0 %v334
        %v336 = vpop.xlane.xlu0 %335
        %v337 = vsub.f32 %v328, %v336
        %v338 = vmul.f32 %v337, 1.442695
        %v339 = vpow.pop %v338
        %v340 = vsel %vm333, %v339, 0.0
        %341 = vadd.xlane.f32.xlu0 %v340
        %v342 = vpop.xlane.xlu0 %341
        %v343 = vrcp.pop %v342
        %v344 = vmul.f32 %v339, %v343
        %v345 = vpack.c.bf16 %v344, %v344
        %346 = vrot.lane.b32.xlu0 %v282, 64
        %v347 = vpop.permute.xlu0 %346
        %v349 = vsel %vm333, %v345, 0
        %vm351 = vcmask 1043456
        %v353 = vsel %vm351, %v347, 0
        %355 = vmatprep.subr.bf16.mxu0 0
        %356 = vmatpush1.bf16.msra.mxu0 0
        %357 = vmatprep.subr.bf16.mxu0 0
        %358 = vmatpush1.bf16.msra.mxu0 0
        %359 = vmatprep.subr.bf16.mxu0 0
        %360 = vmatpush1.bf16.msra.mxu0 0
        %361 = vmatprep.subr.bf16.mxu0 0
        %362 = vmatpush1.bf16.msra.mxu0 0
        %363 = vmatprep.subr.bf16.mxu0 0
        %364 = vmatpush1.bf16.msra.mxu0 0
        %365 = vmatprep.subr.bf16.mxu0 0
        %366 = vmatpush1.bf16.msra.mxu0 0
        %367 = vmatprep.subr.bf16.mxu0 0
        %368 = vmatpush1.bf16.msra.mxu0 0
        %369 = vmatprep.subr.bf16.mxu0 0
        %370 = vmatpush1.bf16.msra.mxu0 %v353
        %371 = vmatprep.subr.bf16.mxu0 0
        %372 = vmatpush2.bf16.msra.mxu0 0
        %373 = vmatprep.subr.bf16.mxu0 0
        %374 = vmatpush2.bf16.msra.mxu0 0
        %375 = vmatprep.subr.bf16.mxu0 0
        %376 = vmatpush2.bf16.msra.mxu0 0
        %377 = vmatprep.subr.bf16.mxu0 0
        %378 = vmatpush2.bf16.msra.mxu0 0
        %379 = vmatprep.subr.bf16.mxu0 0
        %380 = vmatpush2.bf16.msra.mxu0 0
        %381 = vmatprep.subr.bf16.mxu0 0
        %382 = vmatpush2.bf16.msra.mxu0 0
        %383 = vmatprep.subr.bf16.mxu0 0
        %384 = vmatpush2.bf16.msra.mxu0 0
        %385 = vmatprep.subr.bf16.mxu0 0
        %386 = vmatpush2.bf16.msra.mxu0 0
        %387 = vmatprep.mubr.bf16.mxu0 0
        %388 = vmatmul.mubr.bf16.gmra.mxu0 %v349
        %v389 = vpop.f32.mrf.mxu0
        %v390 = vadd.f32 0.0, %v389
        %v391 = vpop.f32.mrf.mxu0
        %v392 = vpop.f32.mrf.mxu0
        %v393 = vpop.f32.mrf.mxu0
        %394 = vdwg.mxu0
        %v395 = vpack.c.bf16 %v390, %v390
        %vm396 = vcmask 27648
        %397 = vst.msk [vmem:[#allocation2] sm:$0xf] %vm396, %v395
        %398 = vrot.lane.b32.xlu0 %v282, 124
        %v399 = vpop.permute.xlu0 %398
        %400 = vrot.lane.b32.xlu0 %v282, 92
        %v401 = vpop.permute.xlu0 %400
        %v403 = vsel %vm286, %v399, 0
        %v406 = vsel %vm286, %v401, 0
        %408 = vmatprep.subr.bf16.mxu0 0
        %409 = vmatpush1.bf16.xpose.msra.mxu0 0
        %410 = vmatprep.subr.bf16.mxu0 0
        %411 = vmatpush1.bf16.xpose.msra.mxu0 0
        %412 = vmatprep.subr.bf16.mxu0 0
        %413 = vmatpush1.bf16.xpose.msra.mxu0 0
        %414 = vmatprep.subr.bf16.mxu0 0
        %415 = vmatpush1.bf16.xpose.msra.mxu0 0
        %416 = vmatprep.subr.bf16.mxu0 0
        %417 = vmatpush1.bf16.xpose.msra.mxu0 0
        %418 = vmatprep.subr.bf16.mxu0 0
        %419 = vmatpush1.bf16.xpose.msra.mxu0 0
        %420 = vmatprep.subr.bf16.mxu0 0
        %421 = vmatpush1.bf16.xpose.msra.mxu0 0
        %422 = vmatprep.subr.bf16.mxu0 0
        %423 = vmatpush1.bf16.xpose.msra.mxu0 %v406
        %424 = vmatprep.subr.bf16.mxu0 0
        %425 = vmatpush2.bf16.xpose.msra.mxu0 0
        %426 = vmatprep.subr.bf16.mxu0 0
        %427 = vmatpush2.bf16.xpose.msra.mxu0 0
        %428 = vmatprep.subr.bf16.mxu0 0
        %429 = vmatpush2.bf16.xpose.msra.mxu0 0
        %430 = vmatprep.subr.bf16.mxu0 0
        %431 = vmatpush2.bf16.xpose.msra.mxu0 0
        %432 = vmatprep.subr.bf16.mxu0 0
        %433 = vmatpush2.bf16.xpose.msra.mxu0 0
        %434 = vmatprep.subr.bf16.mxu0 0
        %435 = vmatpush2.bf16.xpose.msra.mxu0 0
        %436 = vmatprep.subr.bf16.mxu0 0
        %437 = vmatpush2.bf16.xpose.msra.mxu0 0
        %438 = vmatprep.subr.bf16.mxu0 0
        %439 = vmatpush2.bf16.xpose.msra.mxu0 0
        %440 = vmatprep.mubr.bf16.mxu0 0
        %441 = vmatmul.mubr.bf16.gmra.mxu0 %v403
        %v442 = vpop.f32.mrf.mxu0
        %v443 = vadd.f32 0.0, %v442
        %v444 = vpop.f32.mrf.mxu0
        %v445 = vpop.f32.mrf.mxu0
        %v446 = vpop.f32.mrf.mxu0
        %447 = vdwg.mxu0
        %v448 = vsel %vm333, %v443, -inf
        %449 = vmax.xlane.f32.xlu0 %v448
        %v450 = vpop.xlane.xlu0 %449
        %v451 = vsub.f32 %v443, %v450
        %v452 = vmul.f32 %v451, 1.442695
        %v453 = vpow.pop %v452
        %v454 = vsel %vm333, %v453, 0.0
        %455 = vadd.xlane.f32.xlu0 %v454
        %v456 = vpop.xlane.xlu0 %455
        %v457 = vrcp.pop %v456
        %v458 = vmul.f32 %v453, %v457
        %v459 = vpack.c.bf16 %v458, %v458
        %460 = vrot.lane.b32.xlu0 %v282, 60
        %v461 = vpop.permute.xlu0 %460
        %v463 = vsel %vm333, %v459, 0
        %v466 = vsel %vm351, %v461, 0
        %468 = vmatprep.subr.bf16.mxu0 0
        %469 = vmatpush1.bf16.msra.mxu0 0
        %470 = vmatprep.subr.bf16.mxu0 0
        %471 = vmatpush1.bf16.msra.mxu0 0
        %472 = vmatprep.subr.bf16.mxu0 0
        %473 = vmatpush1.bf16.msra.mxu0 0
        %474 = vmatprep.subr.bf16.mxu0 0
        %475 = vmatpush1.bf16.msra.mxu0 0
        %476 = vmatprep.subr.bf16.mxu0 0
        %477 = vmatpush1.bf16.msra.mxu0 0
        %478 = vmatprep.subr.bf16.mxu0 0
        %479 = vmatpush1.bf16.msra.mxu0 0
        %480 = vmatprep.subr.bf16.mxu0 0
        %481 = vmatpush1.bf16.msra.mxu0 0
        %482 = vmatprep.subr.bf16.mxu0 0
        %483 = vmatpush1.bf16.msra.mxu0 %v466
        %484 = vmatprep.subr.bf16.mxu0 0
        %485 = vmatpush2.bf16.msra.mxu0 0
        %486 = vmatprep.subr.bf16.mxu0 0
        %487 = vmatpush2.bf16.msra.mxu0 0
        %488 = vmatprep.subr.bf16.mxu0 0
        %489 = vmatpush2.bf16.msra.mxu0 0
        %490 = vmatprep.subr.bf16.mxu0 0
        %491 = vmatpush2.bf16.msra.mxu0 0
        %492 = vmatprep.subr.bf16.mxu0 0
        %493 = vmatpush2.bf16.msra.mxu0 0
        %494 = vmatprep.subr.bf16.mxu0 0
        %495 = vmatpush2.bf16.msra.mxu0 0
        %496 = vmatprep.subr.bf16.mxu0 0
        %497 = vmatpush2.bf16.msra.mxu0 0
        %498 = vmatprep.subr.bf16.mxu0 0
        %499 = vmatpush2.bf16.msra.mxu0 0
        %500 = vmatprep.mubr.bf16.mxu0 0
        %501 = vmatmul.mubr.bf16.gmra.mxu0 %v463
        %v502 = vpop.f32.mrf.mxu0
        %v503 = vadd.f32 0.0, %v502
        %v504 = vpop.f32.mrf.mxu0
        %v505 = vpop.f32.mrf.mxu0
        %v506 = vpop.f32.mrf.mxu0
        %507 = vdwg.mxu0
        %v508 = vpack.c.bf16 %v503, %v503
        %v510 = vunpack.c.l.b16 %v508
        %v511 = vpack.c.b16 %v510, %v510
        %512 = vrot.lane.b32.xlu0 %v511, 4
        %v513 = vpop.permute.xlu0 %512
        %vm515 = vcmask 60448
        %516 = vst.msk [vmem:[#allocation2] sm:$0xf] %vm515, %v513
        %517 = vrot.lane.b32.xlu0 %v282, 120
        %v518 = vpop.permute.xlu0 %517
        %519 = vrot.lane.b32.xlu0 %v282, 88
        %v520 = vpop.permute.xlu0 %519
        %v522 = vsel %vm286, %v518, 0
        %v525 = vsel %vm286, %v520, 0
        %527 = vmatprep.subr.bf16.mxu0 0
        %528 = vmatpush1.bf16.xpose.msra.mxu0 0
        %529 = vmatprep.subr.bf16.mxu0 0
        %530 = vmatpush1.bf16.xpose.msra.mxu0 0
        %531 = vmatprep.subr.bf16.mxu0 0
        %532 = vmatpush1.bf16.xpose.msra.mxu0 0
        %533 = vmatprep.subr.bf16.mxu0 0
        %534 = vmatpush1.bf16.xpose.msra.mxu0 0
        %535 = vmatprep.subr.bf16.mxu0 0
        %536 = vmatpush1.bf16.xpose.msra.mxu0 0
        %537 = vmatprep.subr.bf16.mxu0 0
        %538 = vmatpush1.bf16.xpose.msra.mxu0 0
        %539 = vmatprep.subr.bf16.mxu0 0
        %540 = vmatpush1.bf16.xpose.msra.mxu0 0
        %541 = vmatprep.subr.bf16.mxu0 0
        %542 = vmatpush1.bf16.xpose.msra.mxu0 %v525
        %543 = vmatprep.subr.bf16.mxu0 0
        %544 = vmatpush2.bf16.xpose.msra.mxu0 0
        %545 = vmatprep.subr.bf16.mxu0 0
        %546 = vmatpush2.bf16.xpose.msra.mxu0 0
        %547 = vmatprep.subr.bf16.mxu0 0
        %548 = vmatpush2.bf16.xpose.msra.mxu0 0
        %549 = vmatprep.subr.bf16.mxu0 0
        %550 = vmatpush2.bf16.xpose.msra.mxu0 0
        %551 = vmatprep.subr.bf16.mxu0 0
        %552 = vmatpush2.bf16.xpose.msra.mxu0 0
        %553 = vmatprep.subr.bf16.mxu0 0
        %554 = vmatpush2.bf16.xpose.msra.mxu0 0
        %555 = vmatprep.subr.bf16.mxu0 0
        %556 = vmatpush2.bf16.xpose.msra.mxu0 0
        %557 = vmatprep.subr.bf16.mxu0 0
        %558 = vmatpush2.bf16.xpose.msra.mxu0 0
        %559 = vmatprep.mubr.bf16.mxu0 0
        %560 = vmatmul.mubr.bf16.gmra.mxu0 %v522
        %v561 = vpop.f32.mrf.mxu0
        %v562 = vadd.f32 0.0, %v561
        %v563 = vpop.f32.mrf.mxu0
        %v564 = vpop.f32.mrf.mxu0
        %v565 = vpop.f32.mrf.mxu0
        %566 = vdwg.mxu0
        %v567 = vsel %vm333, %v562, -inf
        %568 = vmax.xlane.f32.xlu0 %v567
        %v569 = vpop.xlane.xlu0 %568
        %v570 = vsub.f32 %v562, %v569
        %v571 = vmul.f32 %v570, 1.442695
        %v572 = vpow.pop %v571
        %v573 = vsel %vm333, %v572, 0.0
        %574 = vadd.xlane.f32.xlu0 %v573
        %v575 = vpop.xlane.xlu0 %574
        %v576 = vrcp.pop %v575
        %v577 = vmul.f32 %v572, %v576
        %v578 = vpack.c.bf16 %v577, %v577
        %579 = vrot.lane.b32.xlu0 %v282, 56
        %v580 = vpop.permute.xlu0 %579
        %v582 = vsel %vm333, %v578, 0
        %v585 = vsel %vm351, %v580, 0
        %587 = vmatprep.subr.bf16.mxu0 0
        %588 = vmatpush1.bf16.msra.mxu0 0
        %589 = vmatprep.subr.bf16.mxu0 0
        %590 = vmatpush1.bf16.msra.mxu0 0
        %591 = vmatprep.subr.bf16.mxu0 0
        %592 = vmatpush1.bf16.msra.mxu0 0
        %593 = vmatprep.subr.bf16.mxu0 0
        %594 = vmatpush1.bf16.msra.mxu0 0
        %595 = vmatprep.subr.bf16.mxu0 0
        %596 = vmatpush1.bf16.msra.mxu0 0
        %597 = vmatprep.subr.bf16.mxu0 0
        %598 = vmatpush1.bf16.msra.mxu0 0
        %599 = vmatprep.subr.bf16.mxu0 0
        %600 = vmatpush1.bf16.msra.mxu0 0
        %601 = vmatprep.subr.bf16.mxu0 0
        %602 = vmatpush1.bf16.msra.mxu0 %v585
        %603 = vmatprep.subr.bf16.mxu0 0
        %604 = vmatpush2.bf16.msra.mxu0 0
        %605 = vmatprep.subr.bf16.mxu0 0
        %606 = vmatpush2.bf16.msra.mxu0 0
        %607 = vmatprep.subr.bf16.mxu0 0
        %608 = vmatpush2.bf16.msra.mxu0 0
        %609 = vmatprep.subr.bf16.mxu0 0
        %610 = vmatpush2.bf16.msra.mxu0 0
        %611 = vmatprep.subr.bf16.mxu0 0
        %612 = vmatpush2.bf16.msra.mxu0 0
        %613 = vmatprep.subr.bf16.mxu0 0
        %614 = vmatpush2.bf16.msra.mxu0 0
        %615 = vmatprep.subr.bf16.mxu0 0
        %616 = vmatpush2.bf16.msra.mxu0 0
        %617 = vmatprep.subr.bf16.mxu0 0
        %618 = vmatpush2.bf16.msra.mxu0 0
        %619 = vmatprep.mubr.bf16.mxu0 0
        %620 = vmatmul.mubr.bf16.gmra.mxu0 %v582
        %v621 = vpop.f32.mrf.mxu0
        %v622 = vadd.f32 0.0, %v621
        %v623 = vpop.f32.mrf.mxu0
        %v624 = vpop.f32.mrf.mxu0
        %v625 = vpop.f32.mrf.mxu0
        %626 = vdwg.mxu0
        %v627 = vpack.c.bf16 %v622, %v622
        %v629 = vunpack.c.l.b16 %v627
        %v630 = vpack.c.b16 %v629, %v629
        %631 = vrot.lane.b32.xlu0 %v630, 8
        %v632 = vpop.permute.xlu0 %631
        %vm634 = vcmask 93248
        %635 = vst.msk [vmem:[#allocation2] sm:$0xf] %vm634, %v632
        %636 = vrot.lane.b32.xlu0 %v282, 116
        %v637 = vpop.permute.xlu0 %636
        %638 = vrot.lane.b32.xlu0 %v282, 84
        %v639 = vpop.permute.xlu0 %638
        %v641 = vsel %vm286, %v637, 0
        %v644 = vsel %vm286, %v639, 0
        %646 = vmatprep.subr.bf16.mxu0 0
        %647 = vmatpush1.bf16.xpose.msra.mxu0 0
        %648 = vmatprep.subr.bf16.mxu0 0
        %649 = vmatpush1.bf16.xpose.msra.mxu0 0
        %650 = vmatprep.subr.bf16.mxu0 0
        %651 = vmatpush1.bf16.xpose.msra.mxu0 0
        %652 = vmatprep.subr.bf16.mxu0 0
        %653 = vmatpush1.bf16.xpose.msra.mxu0 0
        %654 = vmatprep.subr.bf16.mxu0 0
        %655 = vmatpush1.bf16.xpose.msra.mxu0 0
        %656 = vmatprep.subr.bf16.mxu0 0
        %657 = vmatpush1.bf16.xpose.msra.mxu0 0
        %658 = vmatprep.subr.bf16.mxu0 0
        %659 = vmatpush1.bf16.xpose.msra.mxu0 0
        %660 = vmatprep.subr.bf16.mxu0 0
        %661 = vmatpush1.bf16.xpose.msra.mxu0 %v644
        %662 = vmatprep.subr.bf16.mxu0 0
        %663 = vmatpush2.bf16.xpose.msra.mxu0 0
        %664 = vmatprep.subr.bf16.mxu0 0
        %665 = vmatpush2.bf16.xpose.msra.mxu0 0
        %666 = vmatprep.subr.bf16.mxu0 0
        %667 = vmatpush2.bf16.xpose.msra.mxu0 0
        %668 = vmatprep.subr.bf16.mxu0 0
        %669 = vmatpush2.bf16.xpose.msra.mxu0 0
        %670 = vmatprep.subr.bf16.mxu0 0
        %671 = vmatpush2.bf16.xpose.msra.mxu0 0
        %672 = vmatprep.subr.bf16.mxu0 0
        %673 = vmatpush2.bf16.xpose.msra.mxu0 0
        %674 = vmatprep.subr.bf16.mxu0 0
        %675 = vmatpush2.bf16.xpose.msra.mxu0 0
        %676 = vmatprep.subr.bf16.mxu0 0
        %677 = vmatpush2.bf16.xpose.msra.mxu0 0
        %678 = vmatprep.mubr.bf16.mxu0 0
        %679 = vmatmul.mubr.bf16.gmra.mxu0 %v641
        %v680 = vpop.f32.mrf.mxu0
        %v681 = vadd.f32 0.0, %v680
        %v682 = vpop.f32.mrf.mxu0
        %v683 = vpop.f32.mrf.mxu0
        %v684 = vpop.f32.mrf.mxu0
        %685 = vdwg.mxu0
        %v686 = vsel %vm333, %v681, -inf
        %687 = vmax.xlane.f32.xlu0 %v686
        %v688 = vpop.xlane.xlu0 %687
        %v689 = vsub.f32 %v681, %v688
        %v690 = vmul.f32 %v689, 1.442695
        %v691 = vpow.pop %v690
        %v692 = vsel %vm333, %v691, 0.0
        %693 = vadd.xlane.f32.xlu0 %v692
        %v694 = vpop.xlane.xlu0 %693
        %v695 = vrcp.pop %v694
        %v696 = vmul.f32 %v691, %v695
        %v697 = vpack.c.bf16 %v696, %v696
        %698 = vrot.lane.b32.xlu0 %v282, 52
        %v699 = vpop.permute.xlu0 %698
        %v701 = vsel %vm333, %v697, 0
        %v704 = vsel %vm351, %v699, 0
        %706 = vmatprep.subr.bf16.mxu0 0
        %707 = vmatpush1.bf16.msra.mxu0 0
        %708 = vmatprep.subr.bf16.mxu0 0
        %709 = vmatpush1.bf16.msra.mxu0 0
        %710 = vmatprep.subr.bf16.mxu0 0
        %711 = vmatpush1.bf16.msra.mxu0 0
        %712 = vmatprep.subr.bf16.mxu0 0
        %713 = vmatpush1.bf16.msra.mxu0 0
        %714 = vmatprep.subr.bf16.mxu0 0
        %715 = vmatpush1.bf16.msra.mxu0 0
        %716 = vmatprep.subr.bf16.mxu0 0
        %717 = vmatpush1.bf16.msra.mxu0 0
        %718 = vmatprep.subr.bf16.mxu0 0
        %719 = vmatpush1.bf16.msra.mxu0 0
        %720 = vmatprep.subr.bf16.mxu0 0
        %721 = vmatpush1.bf16.msra.mxu0 %v704
        %722 = vmatprep.subr.bf16.mxu0 0
        %723 = vmatpush2.bf16.msra.mxu0 0
        %724 = vmatprep.subr.bf16.mxu0 0
        %725 = vmatpush2.bf16.msra.mxu0 0
        %726 = vmatprep.subr.bf16.mxu0 0
        %727 = vmatpush2.bf16.msra.mxu0 0
        %728 = vmatprep.subr.bf16.mxu0 0
        %729 = vmatpush2.bf16.msra.mxu0 0
        %730 = vmatprep.subr.bf16.mxu0 0
        %731 = vmatpush2.bf16.msra.mxu0 0
        %732 = vmatprep.subr.bf16.mxu0 0
        %733 = vmatpush2.bf16.msra.mxu0 0
        %734 = vmatprep.subr.bf16.mxu0 0
        %735 = vmatpush2.bf16.msra.mxu0 0
        %736 = vmatprep.subr.bf16.mxu0 0
        %737 = vmatpush2.bf16.msra.mxu0 0
        %738 = vmatprep.mubr.bf16.mxu0 0
        %739 = vmatmul.mubr.bf16.gmra.mxu0 %v701
        %v740 = vpop.f32.mrf.mxu0
        %v741 = vadd.f32 0.0, %v740
        %v742 = vpop.f32.mrf.mxu0
        %v743 = vpop.f32.mrf.mxu0
        %v744 = vpop.f32.mrf.mxu0
        %745 = vdwg.mxu0
        %v746 = vpack.c.bf16 %v741, %v741
        %v748 = vunpack.c.l.b16 %v746
        %v749 = vpack.c.b16 %v748, %v748
        %750 = vrot.lane.b32.xlu0 %v749, 12
        %v751 = vpop.permute.xlu0 %750
        %vm753 = vcmask 126048
        %754 = vst.msk [vmem:[#allocation2] sm:$0xf] %vm753, %v751
        %755 = vrot.lane.b32.xlu0 %v282, 112
        %v756 = vpop.permute.xlu0 %755
        %757 = vrot.lane.b32.xlu0 %v282, 80
        %v758 = vpop.permute.xlu0 %757
        %v760 = vsel %vm286, %v756, 0
        %v763 = vsel %vm286, %v758, 0
        %765 = vmatprep.subr.bf16.mxu0 0
        %766 = vmatpush1.bf16.xpose.msra.mxu0 0
        %767 = vmatprep.subr.bf16.mxu0 0
        %768 = vmatpush1.bf16.xpose.msra.mxu0 0
        %769 = vmatprep.subr.bf16.mxu0 0
        %770 = vmatpush1.bf16.xpose.msra.mxu0 0
        %771 = vmatprep.subr.bf16.mxu0 0
        %772 = vmatpush1.bf16.xpose.msra.mxu0 0
        %773 = vmatprep.subr.bf16.mxu0 0
        %774 = vmatpush1.bf16.xpose.msra.mxu0 0
        %775 = vmatprep.subr.bf16.mxu0 0
        %776 = vmatpush1.bf16.xpose.msra.mxu0 0
        %777 = vmatprep.subr.bf16.mxu0 0
        %778 = vmatpush1.bf16.xpose.msra.mxu0 0
        %779 = vmatprep.subr.bf16.mxu0 0
        %780 = vmatpush1.bf16.xpose.msra.mxu0 %v763
        %781 = vmatprep.subr.bf16.mxu0 0
        %782 = vmatpush2.bf16.xpose.msra.mxu0 0
        %783 = vmatprep.subr.bf16.mxu0 0
        %784 = vmatpush2.bf16.xpose.msra.mxu0 0
        %785 = vmatprep.subr.bf16.mxu0 0
        %786 = vmatpush2.bf16.xpose.msra.mxu0 0
        %787 = vmatprep.subr.bf16.mxu0 0
        %788 = vmatpush2.bf16.xpose.msra.mxu0 0
        %789 = vmatprep.subr.bf16.mxu0 0
        %790 = vmatpush2.bf16.xpose.msra.mxu0 0
        %791 = vmatprep.subr.bf16.mxu0 0
        %792 = vmatpush2.bf16.xpose.msra.mxu0 0
        %793 = vmatprep.subr.bf16.mxu0 0
        %794 = vmatpush2.bf16.xpose.msra.mxu0 0
        %795 = vmatprep.subr.bf16.mxu0 0
        %796 = vmatpush2.bf16.xpose.msra.mxu0 0
        %797 = vmatprep.mubr.bf16.mxu0 0
        %798 = vmatmul.mubr.bf16.gmra.mxu0 %v760
        %v799 = vpop.f32.mrf.mxu0
        %v800 = vadd.f32 0.0, %v799
        %v801 = vpop.f32.mrf.mxu0
        %v802 = vpop.f32.mrf.mxu0
        %v803 = vpop.f32.mrf.mxu0
        %804 = vdwg.mxu0
        %v805 = vsel %vm333, %v800, -inf
        %806 = vmax.xlane.f32.xlu0 %v805
        %v807 = vpop.xlane.xlu0 %806
        %v808 = vsub.f32 %v800, %v807
        %v809 = vmul.f32 %v808, 1.442695
        %v810 = vpow.pop %v809
        %v811 = vsel %vm333, %v810, 0.0
        %812 = vadd.xlane.f32.xlu0 %v811
        %v813 = vpop.xlane.xlu0 %812
        %v814 = vrcp.pop %v813
        %v815 = vmul.f32 %v810, %v814
        %v816 = vpack.c.bf16 %v815, %v815
        %817 = vrot.lane.b32.xlu0 %v282, 48
        %v818 = vpop.permute.xlu0 %817
        %v820 = vsel %vm333, %v816, 0
        %v823 = vsel %vm351, %v818, 0
        %825 = vmatprep.subr.bf16.mxu0 0
        %826 = vmatpush1.bf16.msra.mxu0 0
        %827 = vmatprep.subr.bf16.mxu0 0
        %828 = vmatpush1.bf16.msra.mxu0 0
        %829 = vmatprep.subr.bf16.mxu0 0
        %830 = vmatpush1.bf16.msra.mxu0 0
        %831 = vmatprep.subr.bf16.mxu0 0
        %832 = vmatpush1.bf16.msra.mxu0 0
        %833 = vmatprep.subr.bf16.mxu0 0
        %834 = vmatpush1.bf16.msra.mxu0 0
        %835 = vmatprep.subr.bf16.mxu0 0
        %836 = vmatpush1.bf16.msra.mxu0 0
        %837 = vmatprep.subr.bf16.mxu0 0
        %838 = vmatpush1.bf16.msra.mxu0 0
        %839 = vmatprep.subr.bf16.mxu0 0
        %840 = vmatpush1.bf16.msra.mxu0 %v823
        %841 = vmatprep.subr.bf16.mxu0 0
        %842 = vmatpush2.bf16.msra.mxu0 0
        %843 = vmatprep.subr.bf16.mxu0 0
        %844 = vmatpush2.bf16.msra.mxu0 0
        %845 = vmatprep.subr.bf16.mxu0 0
        %846 = vmatpush2.bf16.msra.mxu0 0
        %847 = vmatprep.subr.bf16.mxu0 0
        %848 = vmatpush2.bf16.msra.mxu0 0
        %849 = vmatprep.subr.bf16.mxu0 0
        %850 = vmatpush2.bf16.msra.mxu0 0
        %851 = vmatprep.subr.bf16.mxu0 0
        %852 = vmatpush2.bf16.msra.mxu0 0
        %853 = vmatprep.subr.bf16.mxu0 0
        %854 = vmatpush2.bf16.msra.mxu0 0
        %855 = vmatprep.subr.bf16.mxu0 0
        %856 = vmatpush2.bf16.msra.mxu0 0
        %857 = vmatprep.mubr.bf16.mxu0 0
        %858 = vmatmul.mubr.bf16.gmra.mxu0 %v820
        %v859 = vpop.f32.mrf.mxu0
        %v860 = vadd.f32 0.0, %v859
        %v861 = vpop.f32.mrf.mxu0
        %v862 = vpop.f32.mrf.mxu0
        %v863 = vpop.f32.mrf.mxu0
        %864 = vdwg.mxu0
        %v865 = vpack.c.bf16 %v860, %v860
        %v867 = vunpack.c.l.b16 %v865
        %v868 = vpack.c.b16 %v867, %v867
        %869 = vrot.lane.b32.xlu0 %v868, 16
        %v870 = vpop.permute.xlu0 %869
        %vm872 = vcmask 158848
        %873 = vst.msk [vmem:[#allocation2] sm:$0xf] %vm872, %v870
        %874 = vrot.lane.b32.xlu0 %v282, 108
        %v875 = vpop.permute.xlu0 %874
        %876 = vrot.lane.b32.xlu0 %v282, 76
        %v877 = vpop.permute.xlu0 %876
        %v879 = vsel %vm286, %v875, 0
        %v882 = vsel %vm286, %v877, 0
        %884 = vmatprep.subr.bf16.mxu0 0
        %885 = vmatpush1.bf16.xpose.msra.mxu0 0
        %886 = vmatprep.subr.bf16.mxu0 0
        %887 = vmatpush1.bf16.xpose.msra.mxu0 0
        %888 = vmatprep.subr.bf16.mxu0 0
        %889 = vmatpush1.bf16.xpose.msra.mxu0 0
        %890 = vmatprep.subr.bf16.mxu0 0
        %891 = vmatpush1.bf16.xpose.msra.mxu0 0
        %892 = vmatprep.subr.bf16.mxu0 0
        %893 = vmatpush1.bf16.xpose.msra.mxu0 0
        %894 = vmatprep.subr.bf16.mxu0 0
        %895 = vmatpush1.bf16.xpose.msra.mxu0 0
        %896 = vmatprep.subr.bf16.mxu0 0
        %897 = vmatpush1.bf16.xpose.msra.mxu0 0
        %898 = vmatprep.subr.bf16.mxu0 0
        %899 = vmatpush1.bf16.xpose.msra.mxu0 %v882
        %900 = vmatprep.subr.bf16.mxu0 0
        %901 = vmatpush2.bf16.xpose.msra.mxu0 0
        %902 = vmatprep.subr.bf16.mxu0 0
        %903 = vmatpush2.bf16.xpose.msra.mxu0 0
        %904 = vmatprep.subr.bf16.mxu0 0
        %905 = vmatpush2.bf16.xpose.msra.mxu0 0
        %906 = vmatprep.subr.bf16.mxu0 0
        %907 = vmatpush2.bf16.xpose.msra.mxu0 0
        %908 = vmatprep.subr.bf16.mxu0 0
        %909 = vmatpush2.bf16.xpose.msra.mxu0 0
        %910 = vmatprep.subr.bf16.mxu0 0
        %911 = vmatpush2.bf16.xpose.msra.mxu0 0
        %912 = vmatprep.subr.bf16.mxu0 0
        %913 = vmatpush2.bf16.xpose.msra.mxu0 0
        %914 = vmatprep.subr.bf16.mxu0 0
        %915 = vmatpush2.bf16.xpose.msra.mxu0 0
        %916 = vmatprep.mubr.bf16.mxu0 0
        %917 = vmatmul.mubr.bf16.gmra.mxu0 %v879
        %v918 = vpop.f32.mrf.mxu0
        %v919 = vadd.f32 0.0, %v918
        %v920 = vpop.f32.mrf.mxu0
        %v921 = vpop.f32.mrf.mxu0
        %v922 = vpop.f32.mrf.mxu0
        %923 = vdwg.mxu0
        %v924 = vsel %vm333, %v919, -inf
        %925 = vmax.xlane.f32.xlu0 %v924
        %v926 = vpop.xlane.xlu0 %925
        %v927 = vsub.f32 %v919, %v926
        %v928 = vmul.f32 %v927, 1.442695
        %v929 = vpow.pop %v928
        %v930 = vsel %vm333, %v929, 0.0
        %931 = vadd.xlane.f32.xlu0 %v930
        %v932 = vpop.xlane.xlu0 %931
        %v933 = vrcp.pop %v932
        %v934 = vmul.f32 %v929, %v933
        %v935 = vpack.c.bf16 %v934, %v934
        %936 = vrot.lane.b32.xlu0 %v282, 44
        %v937 = vpop.permute.xlu0 %936
        %v939 = vsel %vm333, %v935, 0
        %v942 = vsel %vm351, %v937, 0
        %944 = vmatprep.subr.bf16.mxu0 0
        %945 = vmatpush1.bf16.msra.mxu0 0
        %946 = vmatprep.subr.bf16.mxu0 0
        %947 = vmatpush1.bf16.msra.mxu0 0
        %948 = vmatprep.subr.bf16.mxu0 0
        %949 = vmatpush1.bf16.msra.mxu0 0
        %950 = vmatprep.subr.bf16.mxu0 0
        %951 = vmatpush1.bf16.msra.mxu0 0
        %952 = vmatprep.subr.bf16.mxu0 0
        %953 = vmatpush1.bf16.msra.mxu0 0
        %954 = vmatprep.subr.bf16.mxu0 0
        %955 = vmatpush1.bf16.msra.mxu0 0
        %956 = vmatprep.subr.bf16.mxu0 0
        %957 = vmatpush1.bf16.msra.mxu0 0
        %958 = vmatprep.subr.bf16.mxu0 0
        %959 = vmatpush1.bf16.msra.mxu0 %v942
        %960 = vmatprep.subr.bf16.mxu0 0
        %961 = vmatpush2.bf16.msra.mxu0 0
        %962 = vmatprep.subr.bf16.mxu0 0
        %963 = vmatpush2.bf16.msra.mxu0 0
        %964 = vmatprep.subr.bf16.mxu0 0
        %965 = vmatpush2.bf16.msra.mxu0 0
        %966 = vmatprep.subr.bf16.mxu0 0
        %967 = vmatpush2.bf16.msra.mxu0 0
        %968 = vmatprep.subr.bf16.mxu0 0
        %969 = vmatpush2.bf16.msra.mxu0 0
        %970 = vmatprep.subr.bf16.mxu0 0
        %971 = vmatpush2.bf16.msra.mxu0 0
        %972 = vmatprep.subr.bf16.mxu0 0
        %973 = vmatpush2.bf16.msra.mxu0 0
        %974 = vmatprep.subr.bf16.mxu0 0
        %975 = vmatpush2.bf16.msra.mxu0 0
        %976 = vmatprep.mubr.bf16.mxu0 0
        %977 = vmatmul.mubr.bf16.gmra.mxu0 %v939
        %v978 = vpop.f32.mrf.mxu0
        %v979 = vadd.f32 0.0, %v978
        %v980 = vpop.f32.mrf.mxu0
        %v981 = vpop.f32.mrf.mxu0
        %v982 = vpop.f32.mrf.mxu0
        %983 = vdwg.mxu0
        %v984 = vpack.c.bf16 %v979, %v979
        %v986 = vunpack.c.l.b16 %v984
        %v987 = vpack.c.b16 %v986, %v986
        %988 = vrot.lane.b32.xlu0 %v987, 20
        %v989 = vpop.permute.xlu0 %988
        %vm991 = vcmask 191648
        %992 = vst.msk [vmem:[#allocation2] sm:$0xf] %vm991, %v989
        %993 = vrot.lane.b32.xlu0 %v282, 104
        %v994 = vpop.permute.xlu0 %993
        %995 = vrot.lane.b32.xlu0 %v282, 72
        %v996 = vpop.permute.xlu0 %995
        %v998 = vsel %vm286, %v994, 0
        %v1001 = vsel %vm286, %v996, 0
        %1003 = vmatprep.subr.bf16.mxu0 0
        %1004 = vmatpush1.bf16.xpose.msra.mxu0 0
        %1005 = vmatprep.subr.bf16.mxu0 0
        %1006 = vmatpush1.bf16.xpose.msra.mxu0 0
        %1007 = vmatprep.subr.bf16.mxu0 0
        %1008 = vmatpush1.bf16.xpose.msra.mxu0 0
        %1009 = vmatprep.subr.bf16.mxu0 0
        %1010 = vmatpush1.bf16.xpose.msra.mxu0 0
        %1011 = vmatprep.subr.bf16.mxu0 0
        %1012 = vmatpush1.bf16.xpose.msra.mxu0 0
        %1013 = vmatprep.subr.bf16.mxu0 0
        %1014 = vmatpush1.bf16.xpose.msra.mxu0 0
        %1015 = vmatprep.subr.bf16.mxu0 0
        %1016 = vmatpush1.bf16.xpose.msra.mxu0 0
        %1017 = vmatprep.subr.bf16.mxu0 0
        %1018 = vmatpush1.bf16.xpose.msra.mxu0 %v1001
        %1019 = vmatprep.subr.bf16.mxu0 0
        %1020 = vmatpush2.bf16.xpose.msra.mxu0 0
        %1021 = vmatprep.subr.bf16.mxu0 0
        %1022 = vmatpush2.bf16.xpose.msra.mxu0 0
        %1023 = vmatprep.subr.bf16.mxu0 0
        %1024 = vmatpush2.bf16.xpose.msra.mxu0 0
        %1025 = vmatprep.subr.bf16.mxu0 0
        %1026 = vmatpush2.bf16.xpose.msra.mxu0 0
        %1027 = vmatprep.subr.bf16.mxu0 0
        %1028 = vmatpush2.bf16.xpose.msra.mxu0 0
        %1029 = vmatprep.subr.bf16.mxu0 0
        %1030 = vmatpush2.bf16.xpose.msra.mxu0 0
        %1031 = vmatprep.subr.bf16.mxu0 0
        %1032 = vmatpush2.bf16.xpose.msra.mxu0 0
        %1033 = vmatprep.subr.bf16.mxu0 0
        %1034 = vmatpush2.bf16.xpose.msra.mxu0 0
        %1035 = vmatprep.mubr.bf16.mxu0 0
        %1036 = vmatmul.mubr.bf16.gmra.mxu0 %v998
        %v1037 = vpop.f32.mrf.mxu0
        %v1038 = vadd.f32 0.0, %v1037
        %v1039 = vpop.f32.mrf.mxu0
        %v1040 = vpop.f32.mrf.mxu0
        %v1041 = vpop.f32.mrf.mxu0
        %1042 = vdwg.mxu0
        %v1043 = vsel %vm333, %v1038, -inf
        %1044 = vmax.xlane.f32.xlu0 %v1043
        %v1045 = vpop.xlane.xlu0 %1044
        %v1046 = vsub.f32 %v1038, %v1045
        %v1047 = vmul.f32 %v1046, 1.442695
        %v1048 = vpow.pop %v1047
        %v1049 = vsel %vm333, %v1048, 0.0
        %1050 = vadd.xlane.f32.xlu0 %v1049
        %v1051 = vpop.xlane.xlu0 %1050
        %v1052 = vrcp.pop %v1051
        %v1053 = vmul.f32 %v1048, %v1052
        %v1054 = vpack.c.bf16 %v1053, %v1053
        %1055 = vrot.lane.b32.xlu0 %v282, 40
        %v1056 = vpop.permute.xlu0 %1055
        %v1058 = vsel %vm333, %v1054, 0
        %v1061 = vsel %vm351, %v1056, 0
        %1063 = vmatprep.subr.bf16.mxu0 0
        %1064 = vmatpush1.bf16.msra.mxu0 0
        %1065 = vmatprep.subr.bf16.mxu0 0
        %1066 = vmatpush1.bf16.msra.mxu0 0
        %1067 = vmatprep.subr.bf16.mxu0 0
        %1068 = vmatpush1.bf16.msra.mxu0 0
        %1069 = vmatprep.subr.bf16.mxu0 0
        %1070 = vmatpush1.bf16.msra.mxu0 0
        %1071 = vmatprep.subr.bf16.mxu0 0
        %1072 = vmatpush1.bf16.msra.mxu0 0
        %1073 = vmatprep.subr.bf16.mxu0 0
        %1074 = vmatpush1.bf16.msra.mxu0 0
        %1075 = vmatprep.subr.bf16.mxu0 0
        %1076 = vmatpush1.bf16.msra.mxu0 0
        %1077 = vmatprep.subr.bf16.mxu0 0
        %1078 = vmatpush1.bf16.msra.mxu0 %v1061
        %1079 = vmatprep.subr.bf16.mxu0 0
        %1080 = vmatpush2.bf16.msra.mxu0 0
        %1081 = vmatprep.subr.bf16.mxu0 0
        %1082 = vmatpush2.bf16.msra.mxu0 0
        %1083 = vmatprep.subr.bf16.mxu0 0
        %1084 = vmatpush2.bf16.msra.mxu0 0
        %1085 = vmatprep.subr.bf16.mxu0 0
        %1086 = vmatpush2.bf16.msra.mxu0 0
        %1087 = vmatprep.subr.bf16.mxu0 0
        %1088 = vmatpush2.bf16.msra.mxu0 0
        %1089 = vmatprep.subr.bf16.mxu0 0
        %1090 = vmatpush2.bf16.msra.mxu0 0
        %1091 = vmatprep.subr.bf16.mxu0 0
        %1092 = vmatpush2.bf16.msra.mxu0 0
        %1093 = vmatprep.subr.bf16.mxu0 0
        %1094 = vmatpush2.bf16.msra.mxu0 0
        %1095 = vmatprep.mubr.bf16.mxu0 0
        %1096 = vmatmul.mubr.bf16.gmra.mxu0 %v1058
        %v1097 = vpop.f32.mrf.mxu0
        %v1098 = vadd.f32 0.0, %v1097
        %v1099 = vpop.f32.mrf.mxu0
        %v1100 = vpop.f32.mrf.mxu0
        %v1101 = vpop.f32.mrf.mxu0
        %1102 = vdwg.mxu0
        %v1103 = vpack.c.bf16 %v1098, %v1098
        %v1105 = vunpack.c.l.b16 %v1103
        %v1106 = vpack.c.b16 %v1105, %v1105
        %1107 = vrot.lane.b32.xlu0 %v1106, 24
        %v1108 = vpop.permute.xlu0 %1107
        %vm1110 = vcmask 224448
        %1111 = vst.msk [vmem:[#allocation2] sm:$0xf] %vm1110, %v1108
        %1112 = vrot.lane.b32.xlu0 %v282, 100
        %v1113 = vpop.permute.xlu0 %1112
        %1114 = vrot.lane.b32.xlu0 %v282, 68
        %v1115 = vpop.permute.xlu0 %1114
        %v1117 = vsel %vm286, %v1113, 0
        %v1120 = vsel %vm286, %v1115, 0
        %1122 = vmatprep.subr.bf16.mxu0 0
        %1123 = vmatpush1.bf16.xpose.msra.mxu0 0
        %1124 = vmatprep.subr.bf16.mxu0 0
        %1125 = vmatpush1.bf16.xpose.msra.mxu0 0
        %1126 = vmatprep.subr.bf16.mxu0 0
        %1127 = vmatpush1.bf16.xpose.msra.mxu0 0
        %1128 = vmatprep.subr.bf16.mxu0 0
        %1129 = vmatpush1.bf16.xpose.msra.mxu0 0
        %1130 = vmatprep.subr.bf16.mxu0 0
        %1131 = vmatpush1.bf16.xpose.msra.mxu0 0
        %1132 = vmatprep.subr.bf16.mxu0 0
        %1133 = vmatpush1.bf16.xpose.msra.mxu0 0
        %1134 = vmatprep.subr.bf16.mxu0 0
        %1135 = vmatpush1.bf16.xpose.msra.mxu0 0
        %1136 = vmatprep.subr.bf16.mxu0 0
        %1137 = vmatpush1.bf16.xpose.msra.mxu0 %v1120
        %1138 = vmatprep.subr.bf16.mxu0 0
        %1139 = vmatpush2.bf16.xpose.msra.mxu0 0
        %1140 = vmatprep.subr.bf16.mxu0 0
        %1141 = vmatpush2.bf16.xpose.msra.mxu0 0
        %1142 = vmatprep.subr.bf16.mxu0 0
        %1143 = vmatpush2.bf16.xpose.msra.mxu0 0
        %1144 = vmatprep.subr.bf16.mxu0 0
        %1145 = vmatpush2.bf16.xpose.msra.mxu0 0
        %1146 = vmatprep.subr.bf16.mxu0 0
        %1147 = vmatpush2.bf16.xpose.msra.mxu0 0
        %1148 = vmatprep.subr.bf16.mxu0 0
        %1149 = vmatpush2.bf16.xpose.msra.mxu0 0
        %1150 = vmatprep.subr.bf16.mxu0 0
        %1151 = vmatpush2.bf16.xpose.msra.mxu0 0
        %1152 = vmatprep.subr.bf16.mxu0 0
        %1153 = vmatpush2.bf16.xpose.msra.mxu0 0
        %1154 = vmatprep.mubr.bf16.mxu0 0
        %1155 = vmatmul.mubr.bf16.gmra.mxu0 %v1117
        %v1156 = vpop.f32.mrf.mxu0
        %v1157 = vadd.f32 0.0, %v1156
        %v1158 = vpop.f32.mrf.mxu0
        %v1159 = vpop.f32.mrf.mxu0
        %v1160 = vpop.f32.mrf.mxu0
        %1161 = vdwg.mxu0
        %v1162 = vsel %vm333, %v1157, -inf
        %1163 = vmax.xlane.f32.xlu0 %v1162
        %v1164 = vpop.xlane.xlu0 %1163
        %v1165 = vsub.f32 %v1157, %v1164
        %v1166 = vmul.f32 %v1165, 1.442695
        %v1167 = vpow.pop %v1166
        %v1168 = vsel %vm333, %v1167, 0.0
        %1169 = vadd.xlane.f32.xlu0 %v1168
        %v1170 = vpop.xlane.xlu0 %1169
        %v1171 = vrcp.pop %v1170
        %v1172 = vmul.f32 %v1167, %v1171
        %v1173 = vpack.c.bf16 %v1172, %v1172
        %1174 = vrot.lane.b32.xlu0 %v282, 36
        %v1175 = vpop.permute.xlu0 %1174
        %v1177 = vsel %vm333, %v1173, 0
        %v1180 = vsel %vm351, %v1175, 0
        %1182 = vmatprep.subr.bf16.mxu0 0
        %1183 = vmatpush1.bf16.msra.mxu0 0
        %1184 = vmatprep.subr.bf16.mxu0 0
        %1185 = vmatpush1.bf16.msra.mxu0 0
        %1186 = vmatprep.subr.bf16.mxu0 0
        %1187 = vmatpush1.bf16.msra.mxu0 0
        %1188 = vmatprep.subr.bf16.mxu0 0
        %1189 = vmatpush1.bf16.msra.mxu0 0
        %1190 = vmatprep.subr.bf16.mxu0 0
        %1191 = vmatpush1.bf16.msra.mxu0 0
        %1192 = vmatprep.subr.bf16.mxu0 0
        %1193 = vmatpush1.bf16.msra.mxu0 0
        %1194 = vmatprep.subr.bf16.mxu0 0
        %1195 = vmatpush1.bf16.msra.mxu0 0
        %1196 = vmatprep.subr.bf16.mxu0 0
        %1197 = vmatpush1.bf16.msra.mxu0 %v1180
        %1198 = vmatprep.subr.bf16.mxu0 0
        %1199 = vmatpush2.bf16.msra.mxu0 0
        %1200 = vmatprep.subr.bf16.mxu0 0
        %1201 = vmatpush2.bf16.msra.mxu0 0
        %1202 = vmatprep.subr.bf16.mxu0 0
        %1203 = vmatpush2.bf16.msra.mxu0 0
        %1204 = vmatprep.subr.bf16.mxu0 0
        %1205 = vmatpush2.bf16.msra.mxu0 0
        %1206 = vmatprep.subr.bf16.mxu0 0
        %1207 = vmatpush2.bf16.msra.mxu0 0
        %1208 = vmatprep.subr.bf16.mxu0 0
        %1209 = vmatpush2.bf16.msra.mxu0 0
        %1210 = vmatprep.subr.bf16.mxu0 0
        %1211 = vmatpush2.bf16.msra.mxu0 0
        %1212 = vmatprep.subr.bf16.mxu0 0
        %1213 = vmatpush2.bf16.msra.mxu0 0
        %1214 = vmatprep.mubr.bf16.mxu0 0
        %1215 = vmatmul.mubr.bf16.gmra.mxu0 %v1177
        %v1216 = vpop.f32.mrf.mxu0
        %v1217 = vadd.f32 0.0, %v1216
        %v1218 = vpop.f32.mrf.mxu0
        %v1219 = vpop.f32.mrf.mxu0
        %v1220 = vpop.f32.mrf.mxu0
        %1221 = vdwg.mxu0
        %v1222 = vpack.c.bf16 %v1217, %v1217
        %v1224 = vunpack.c.l.b16 %v1222
        %v1225 = vpack.c.b16 %v1224, %v1224
        %1226 = vrot.lane.b32.xlu0 %v1225, 28
        %v1227 = vpop.permute.xlu0 %1226
        %vm1229 = vcmask 257248
        %1230 = vst.msk [vmem:[#allocation2] sm:$0xf] %vm1229, %v1227
        %v1231 = vld [vmem:[#allocation2] sm:$0xf]
        %v1236 = vunpack.c.l.b16 %v222
        %v1237 = vunpack.c.l.b16 %v223
        %v1238 = vunpack.c.l.b16 %v224
        %v1239 = vunpack.c.l.b16 %v225
        %v1240 = vpack.c.b16 %v1237, %v1236
        %v1241 = vpack.c.b16 %v1239, %v1238
        %v1245 = vsel %vm238, %v1231, 0
        %1247 = vmatprep.subr.bf16.mxu0 0
        %1248 = vmatpush1.bf16.msra.mxu0 0
        %1249 = vmatprep.subr.bf16.mxu0 0
        %1250 = vmatpush1.bf16.msra.mxu0 0
        %1251 = vmatprep.subr.bf16.mxu0 0
        %1252 = vmatpush1.bf16.msra.mxu0 0
        %1253 = vmatprep.subr.bf16.mxu0 0
        %1254 = vmatpush1.bf16.msra.mxu0 0
        %1255 = vmatprep.subr.bf16.mxu0 0
        %1256 = vmatpush1.bf16.msra.mxu0 0
        %1257 = vmatprep.subr.bf16.mxu0 0
        %1258 = vmatpush1.bf16.msra.mxu0 0
        %1259 = vmatprep.subr.bf16.mxu0 0
        %1260 = vmatpush1.bf16.msra.mxu0 %v1241
        %1261 = vmatprep.subr.bf16.mxu0 0
        %1262 = vmatpush1.bf16.msra.mxu0 %v1240
        %1263 = vmatprep.subr.bf16.mxu0 0
        %1264 = vmatpush2.bf16.msra.mxu0 0
        %1265 = vmatprep.subr.bf16.mxu0 0
        %1266 = vmatpush2.bf16.msra.mxu0 0
        %1267 = vmatprep.subr.bf16.mxu0 0
        %1268 = vmatpush2.bf16.msra.mxu0 0
        %1269 = vmatprep.subr.bf16.mxu0 0
        %1270 = vmatpush2.bf16.msra.mxu0 0
        %1271 = vmatprep.subr.bf16.mxu0 0
        %1272 = vmatpush2.bf16.msra.mxu0 0
        %1273 = vmatprep.subr.bf16.mxu0 0
        %1274 = vmatpush2.bf16.msra.mxu0 0
        %1275 = vmatprep.subr.bf16.mxu0 0
        %1276 = vmatpush2.bf16.msra.mxu0 0
        %1277 = vmatprep.subr.bf16.mxu0 0
        %1278 = vmatpush2.bf16.msra.mxu0 0
        %1279 = vmatprep.mubr.bf16.mxu0 0
        %1280 = vmatmul.mubr.bf16.gmra.mxu0 %v1245
        %v1281 = vpop.f32.mrf.mxu0
        %v1282 = vadd.f32 0.0, %v1281
        %v1283 = vpop.f32.mrf.mxu0
        %v1284 = vpop.f32.mrf.mxu0
        %v1285 = vpop.f32.mrf.mxu0
        %1286 = vdwg.mxu0
        %1287 = vst.msk [vmem:[%s214] sm:$0xff] %vm238, %v1282
        %s1288 = sand.u32 %s97, 1
        %s1289 = scalar_lea.sflag [#allocation5], %s1288
        %s1290 = sand.u32 %s97, 1
        %s1291 = smul.addr %s1290, 8
        %s1292 = scalar_lea.vmem [#allocation9], %s1291
        // Predicated region
        $region45: #{tpu_custom_call.1} parent=31 // pred_check
          %p1293 = pneg %p107
        $region46: #{tpu_custom_call.1} parent=31 // pred_check_branch
          %1295 = sbr.rel (%p1293) target = $region48
        $region47: #{tpu_custom_call.1} parent=31 // pred_region
          %s1297 = ssub.s32 128, 128
          %1298 = vsyncadd %s1289, %s1297
          %s1299 = smul.addr %s21, 128
          %s1300 = scalar_lea.hbm %s3, %s1299
          %s1302 = sshll.u32 %s1292, 4
          %s1303 = int_to_ptr.vmem [resolvable:$true] %s1302
          %1305 = dma.vmem_to_hbm [thread:$0]  %s1303, 128, %s1300, %s1289
        $region48: #{tpu_custom_call.1} parent=31 // pred_fallthru
          _
      $region32: #{tpu_custom_call.1} parent=5 // pred_fallthru
        _
      %p1306 = scmp.le.s32.totalorder 2, %s16
      // Predicated region
      $region49: #{tpu_custom_call.1} parent=5 // pred_check
        %p1307 = pneg %p1306
      $region50: #{tpu_custom_call.1} parent=5 // pred_check_branch
        %1309 = sbr.rel (%p1307) target = $region52
      $region51: #{tpu_custom_call.1} parent=5 // pred_region
        %s1310 = ssub.s32 %s16, 2
        // Predicated region
        $region53: #{tpu_custom_call.1} parent=51 // pred_check
          %p1311 = pneg %p113
        $region54: #{tpu_custom_call.1} parent=51 // pred_check_branch
          %1313 = sbr.rel (%p1311) target = $region56
        $region55: #{tpu_custom_call.1} parent=51 // pred_region
          %s1314 = sand.u32 %s98, 1
          %s1315 = scalar_lea.sflag [#allocation5], %s1314
          %s1316 = sand.u32 %s98, 1
          %s1317 = smul.addr %s1316, 8
          %s1318 = scalar_lea.vmem [#allocation9], %s1317
          %1319 = dma.done %s1315, 128
        $region56: #{tpu_custom_call.1} parent=51 // pred_fallthru
          _
      $region52: #{tpu_custom_call.1} parent=5 // pred_fallthru
        _
    $region6: #{tpu_custom_call.1} parent=1 // loop_footer
      %s20 = sadd.s32 1, %s16
    $region7: #{tpu_custom_call.1} parent=1 // loop_footer_branch
      %15 = sbr.rel target = $region3
    $region8: #{tpu_custom_call.1} parent=1 // loop_exit
      _
    %1320 = vsyncpa [#allocation4], 1
    %s1321 = scalar_lea.sflag [#allocation4], 1
    %1322 = vsyncpa %s1321, 1
    %1323 = vsyncpa [#allocation7], 1
    %1324 = vsyncpa [#allocation5], 1
    %s1325 = scalar_lea.sflag [#allocation5], 1
    %1326 = vsyncpa %s1325, 1

</llo_original>
